<compile_context>
chip_gen: v7x
topology: tpu7x:2x2x1
jax: 0.10.0
libtpu: 0.0.40
codegen_flags: <defaults>
</compile_context>

<pallas_src>
import functools
import numpy as np
import jax
import jax.numpy as jnp
from jax import lax
from jax.experimental import pallas as pl
from jax.experimental.pallas import tpu as pltpu

# tap index k = (dy+1)*3 + (dx+1) == ky*3 + kx of the 3x3 kernel
_TAPS = tuple((dy, dx) for dy in (-1, 0, 1) for dx in (-1, 0, 1))


# ------------------------------- kernel -------------------------------------

def _basic_block_kernel(x_ref, m_ref, w1_ref, s1_ref, b1_ref,
                        w2_ref, s2_ref, b2_ref, o_ref, *, H, W, nb):
    # x_ref:  (nb, C, H*W)   channels on sublanes, lane axis = H*W (lane-dense)
    # m_ref:  (9, C, H*W)    per-tap validity masks, pre-broadcast over channels
    # w1_ref: (9, P, C)      conv1 per-tap weight matrices (bf16)
    # w2_ref: (9, P, P)      conv2 per-tap weight matrices (bf16)
    # s*/b*:  (P, 1)         folded BatchNorm scale / bias (f32)
    # o_ref:  (nb, P, H*W)
    HW = H * W

    # Hoist shared loads once: reused for every image and both convs.
    masks = [m_ref[k] for k in range(9)]            # each (C, HW) f32
    w1 = [w1_ref[k] for k in range(9)]              # each (P, C) bf16
    w2 = [w2_ref[k] for k in range(9)]              # each (P, P) bf16
    s1, b1 = s1_ref[...], b1_ref[...]               # (P, 1) f32
    s2, b2 = s2_ref[...], b2_ref[...]

    def conv3x3(act, w_taps):
        # act: (Cin, HW) f32.  out[co, p] = sum_k sum_ci w_k[co,ci] * act[ci, p + s_k]
        # where taps leaving the image are zeroed by the masks (== padding=1).
        acc = None
        for k, (dy, dx) in enumerate(_TAPS):
            s = dy * W + dx
            if s == 0:
                tap = act                            # center tap: no roll, all valid
            else:
                # position p sees act[(p + s) mod HW]; mask zeroes the wrap.
                tap = pltpu.roll(act, (-s) % HW, axis=1) * masks[k]
            part = jnp.dot(w_taps[k], tap.astype(jnp.bfloat16),
                           preferred_element_type=jnp.float32)
            acc = part if acc is None else acc + part
        return acc                                   # (Cout, HW) f32

    for n in range(nb):                # short unrolled loop over images in the block
        x = x_ref[n]                                            # (C, HW) f32
        out1 = jnp.maximum(conv3x3(x, w1) * s1 + b1, 0.0)       # conv1 + bn1 + relu
        out2 = conv3x3(out1, w2) * s2 + b2                      # conv2 + bn2
        o_ref[n] = jnp.maximum(out2 + x, 0.0)                   # + residual, relu


# ------------------------------- wrapper ------------------------------------

def _make_masks(H, W, C):
    yy, xx = np.meshgrid(np.arange(H), np.arange(W), indexing='ij')
    rows = []
    for dy, dx in _TAPS:
        m = ((yy + dy >= 0) & (yy + dy < H) &
             (xx + dx >= 0) & (xx + dx < W))
        rows.append(np.broadcast_to(m.reshape(1, -1), (C, H * W)))
    return jnp.asarray(np.stack(rows, 0).astype(np.float32))     # (9, C, H*W)


def basic_block_pallas(x_nchw, params, *, images_per_block=None):
    """x_nchw: (N, C, H, W) float32; params: dict of kernel-ready arrays."""
    N, C, H, W = x_nchw.shape
    P = params['w1'].shape[1]
    assert C == P, "BasicBlock with downsample=None requires inplanes == planes"
    HW = H * W

    if images_per_block is None:
        # Fold the whole (small) batch into a single grid step; see TODO above
        # for the v7x two-TensorCore / production-size tiling variant.
        images_per_block = N
    assert N % images_per_block == 0
    num_blocks = N // images_per_block

    x_flat = x_nchw.reshape(N, C, HW)            # free reshape, no transpose
    masks = _make_masks(H, W, C)

    kernel = functools.partial(_basic_block_kernel, H=H, W=W, nb=images_per_block)

    full = lambda a: pl.BlockSpec(a.shape, lambda i: (0,) * a.ndim)
    in_specs = [
        pl.BlockSpec((images_per_block, C, HW), lambda i: (i, 0, 0)),
        full(masks),
        full(params['w1']), full(params['s1']), full(params['b1']),
        full(params['w2']), full(params['s2']), full(params['b2']),
    ]

    out = pl.pallas_call(
        kernel,
        out_shape=jax.ShapeDtypeStruct((N, P, HW), jnp.float32),
        grid=(num_blocks,),
        in_specs=in_specs,
        out_specs=pl.BlockSpec((images_per_block, P, HW), lambda i: (i, 0, 0)),
        compiler_params=pltpu.CompilerParams(
            dimension_semantics=("parallel",),
            vmem_limit_bytes=32 * 1024 * 1024),
    )(x_flat, masks, params['w1'], params['s1'], params['b1'],
      params['w2'], params['s2'], params['b2'])

    return out.reshape(N, P, H, W)               # free reshape back to NCHW


# --------------------------- parameter setup --------------------------------

def fold_bn(gamma, beta, mean, var, eps=1e-5):
    scale = gamma / jnp.sqrt(var + eps)
    bias = beta - mean * scale
    return scale[:, None].astype(jnp.float32), bias[:, None].astype(jnp.float32)


def make_params(key, planes):
    ks = jax.random.split(key, 10)
    # PyTorch conv weights: (Cout, Cin, kH, kW)
    w1 = jax.random.normal(ks[0], (planes, planes, 3, 3), jnp.float32) * 0.1
    w2 = jax.random.normal(ks[1], (planes, planes, 3, 3), jnp.float32) * 0.1

    def bn(k0, k1, k2, k3, c):
        gamma = jax.random.uniform(k0, (c,), jnp.float32, 0.5, 1.5)
        beta = jax.random.normal(k1, (c,), jnp.float32) * 0.1
        mean = jax.random.normal(k2, (c,), jnp.float32) * 0.1
        var = jax.random.uniform(k3, (c,), jnp.float32, 0.5, 1.5)
        return gamma, beta, mean, var

    s1, b1 = fold_bn(*bn(ks[2], ks[3], ks[4], ks[5], planes))
    s2, b2 = fold_bn(*bn(ks[6], ks[7], ks[8], ks[9], planes))

    # Per-tap weight matrices, tap index k = ky*3 + kx; bf16 for the MXU.
    w1_taps = jnp.transpose(w1, (2, 3, 0, 1)).reshape(9, planes, planes)
    w2_taps = jnp.transpose(w2, (2, 3, 0, 1)).reshape(9, planes, planes)

    params = {'w1': w1_taps.astype(jnp.bfloat16),
              'w2': w2_taps.astype(jnp.bfloat16),
              's1': s1, 'b1': b1, 's2': s2, 'b2': b2}
    return params, (w1, w2)


# ----------------------------- JAX reference ---------------------------------

def reference(x_nchw, torch_weights, params):
    w1, w2 = torch_weights
    dn = ('NCHW', 'OIHW', 'NCHW')

    def conv(a, w):
        return lax.conv_general_dilated(a, w, window_strides=(1, 1),
                                        padding=((1, 1), (1, 1)),
                                        dimension_numbers=dn,
                                        precision=lax.Precision.HIGHEST)

    def bn(a, s, b):
        return a * s[:, 0][None, :, None, None] + b[:, 0][None, :, None, None]

    out = jax.nn.relu(bn(conv(x_nchw, w1), params['s1'], params['b1']))
    out = bn(conv(out, w2), params['s2'], params['b2'])
    return jax.nn.relu(out + x_nchw)


if __name__ == "__main__":
    key = jax.random.PRNGKey(0)
    k_x, k_p = jax.random.split(key)

    N, C, H, W = 2, 4, 16, 16            # inplanes == planes == 4, stride=1
    x = jax.random.normal(k_x, (N, C, H, W), jnp.float32)
    params, torch_weights = make_params(k_p, C)

    out = jax.block_until_ready(basic_block_pallas(x, params))
    ref = jax.block_until_ready(reference(x, torch_weights, params))

    # bf16 matmul operands in the kernel vs f32 reference -> loose tolerance.
    np.testing.assert_allclose(np.asarray(out), np.asarray(ref),
                               rtol=5e-2, atol=5e-2)
    print("KERNEL_OK")
</pallas_src>

<mosaic_0001>
module attributes {stable_mosaic.version = 11 : i64} {
  func.func @_basic_block_kernel(%arg0: i32, %arg1: memref<2x4x256xf32, #tpu.memory_space<vmem>>, %arg2: memref<9x4x256xf32, #tpu.memory_space<vmem>>, %arg3: memref<9x4x4xbf16, #tpu.memory_space<vmem>>, %arg4: memref<4x1xf32, #tpu.memory_space<vmem>>, %arg5: memref<4x1xf32, #tpu.memory_space<vmem>>, %arg6: memref<9x4x4xbf16, #tpu.memory_space<vmem>>, %arg7: memref<4x1xf32, #tpu.memory_space<vmem>>, %arg8: memref<4x1xf32, #tpu.memory_space<vmem>>, %arg9: memref<2x4x256xf32, #tpu.memory_space<vmem>>) attributes {dimension_semantics = [#tpu.dimension_semantics<parallel>], iteration_bounds = array<i64: 1>, scalar_prefetch = 0 : i64, scratch_operands = 0 : i64, tpu.core_type = #tpu.core_type<tc>, window_params = [{transform_indices = @transform_0, window_bounds = array<i64: 2, 4, 256>}, {pipeline_mode = #tpu.pipeline_mode<synchronous>, transform_indices = @transform_1, window_bounds = array<i64: 9, 4, 256>}, {pipeline_mode = #tpu.pipeline_mode<synchronous>, transform_indices = @transform_2, window_bounds = array<i64: 9, 4, 4>}, {pipeline_mode = #tpu.pipeline_mode<synchronous>, transform_indices = @transform_3, window_bounds = array<i64: 4, 1>}, {pipeline_mode = #tpu.pipeline_mode<synchronous>, transform_indices = @transform_4, window_bounds = array<i64: 4, 1>}, {pipeline_mode = #tpu.pipeline_mode<synchronous>, transform_indices = @transform_5, window_bounds = array<i64: 9, 4, 4>}, {pipeline_mode = #tpu.pipeline_mode<synchronous>, transform_indices = @transform_6, window_bounds = array<i64: 4, 1>}, {pipeline_mode = #tpu.pipeline_mode<synchronous>, transform_indices = @transform_7, window_bounds = array<i64: 4, 1>}, {transform_indices = @transform_8, window_bounds = array<i64: 2, 4, 256>}]} {
    %c0 = arith.constant 0 : index
    %c0_0 = arith.constant 0 : index
    %c0_1 = arith.constant 0 : index
    %0 = vector.load %arg2[%c0, %c0_0, %c0_1] : memref<9x4x256xf32, #tpu.memory_space<vmem>>, vector<1x4x256xf32>
    %1 = vector.shape_cast %0 : vector<1x4x256xf32> to vector<4x256xf32>
    %c1 = arith.constant 1 : index
    %c0_2 = arith.constant 0 : index
    %c0_3 = arith.constant 0 : index
    %2 = vector.load %arg2[%c1, %c0_2, %c0_3] : memref<9x4x256xf32, #tpu.memory_space<vmem>>, vector<1x4x256xf32>
    %3 = vector.shape_cast %2 : vector<1x4x256xf32> to vector<4x256xf32>
    %c2 = arith.constant 2 : index
    %c0_4 = arith.constant 0 : index
    %c0_5 = arith.constant 0 : index
    %4 = vector.load %arg2[%c2, %c0_4, %c0_5] : memref<9x4x256xf32, #tpu.memory_space<vmem>>, vector<1x4x256xf32>
    %5 = vector.shape_cast %4 : vector<1x4x256xf32> to vector<4x256xf32>
    %c3 = arith.constant 3 : index
    %c0_6 = arith.constant 0 : index
    %c0_7 = arith.constant 0 : index
    %6 = vector.load %arg2[%c3, %c0_6, %c0_7] : memref<9x4x256xf32, #tpu.memory_space<vmem>>, vector<1x4x256xf32>
    %7 = vector.shape_cast %6 : vector<1x4x256xf32> to vector<4x256xf32>
    %c5 = arith.constant 5 : index
    %c0_8 = arith.constant 0 : index
    %c0_9 = arith.constant 0 : index
    %8 = vector.load %arg2[%c5, %c0_8, %c0_9] : memref<9x4x256xf32, #tpu.memory_space<vmem>>, vector<1x4x256xf32>
    %9 = vector.shape_cast %8 : vector<1x4x256xf32> to vector<4x256xf32>
    %c6 = arith.constant 6 : index
    %c0_10 = arith.constant 0 : index
    %c0_11 = arith.constant 0 : index
    %10 = vector.load %arg2[%c6, %c0_10, %c0_11] : memref<9x4x256xf32, #tpu.memory_space<vmem>>, vector<1x4x256xf32>
    %11 = vector.shape_cast %10 : vector<1x4x256xf32> to vector<4x256xf32>
    %c7 = arith.constant 7 : index
    %c0_12 = arith.constant 0 : index
    %c0_13 = arith.constant 0 : index
    %12 = vector.load %arg2[%c7, %c0_12, %c0_13] : memref<9x4x256xf32, #tpu.memory_space<vmem>>, vector<1x4x256xf32>
    %13 = vector.shape_cast %12 : vector<1x4x256xf32> to vector<4x256xf32>
    %c8 = arith.constant 8 : index
    %c0_14 = arith.constant 0 : index
    %c0_15 = arith.constant 0 : index
    %14 = vector.load %arg2[%c8, %c0_14, %c0_15] : memref<9x4x256xf32, #tpu.memory_space<vmem>>, vector<1x4x256xf32>
    %15 = vector.shape_cast %14 : vector<1x4x256xf32> to vector<4x256xf32>
    %c0_16 = arith.constant 0 : index
    %c0_17 = arith.constant 0 : index
    %c0_18 = arith.constant 0 : index
    %16 = vector.load %arg3[%c0_16, %c0_17, %c0_18] : memref<9x4x4xbf16, #tpu.memory_space<vmem>>, vector<1x4x4xbf16>
    %17 = vector.shape_cast %16 : vector<1x4x4xbf16> to vector<4x4xbf16>
    %c1_19 = arith.constant 1 : index
    %c0_20 = arith.constant 0 : index
    %c0_21 = arith.constant 0 : index
    %18 = vector.load %arg3[%c1_19, %c0_20, %c0_21] : memref<9x4x4xbf16, #tpu.memory_space<vmem>>, vector<1x4x4xbf16>
    %19 = vector.shape_cast %18 : vector<1x4x4xbf16> to vector<4x4xbf16>
    %c2_22 = arith.constant 2 : index
    %c0_23 = arith.constant 0 : index
    %c0_24 = arith.constant 0 : index
    %20 = vector.load %arg3[%c2_22, %c0_23, %c0_24] : memref<9x4x4xbf16, #tpu.memory_space<vmem>>, vector<1x4x4xbf16>
    %21 = vector.shape_cast %20 : vector<1x4x4xbf16> to vector<4x4xbf16>
    %c3_25 = arith.constant 3 : index
    %c0_26 = arith.constant 0 : index
    %c0_27 = arith.constant 0 : index
    %22 = vector.load %arg3[%c3_25, %c0_26, %c0_27] : memref<9x4x4xbf16, #tpu.memory_space<vmem>>, vector<1x4x4xbf16>
    %23 = vector.shape_cast %22 : vector<1x4x4xbf16> to vector<4x4xbf16>
    %c4 = arith.constant 4 : index
    %c0_28 = arith.constant 0 : index
    %c0_29 = arith.constant 0 : index
    %24 = vector.load %arg3[%c4, %c0_28, %c0_29] : memref<9x4x4xbf16, #tpu.memory_space<vmem>>, vector<1x4x4xbf16>
    %25 = vector.shape_cast %24 : vector<1x4x4xbf16> to vector<4x4xbf16>
    %c5_30 = arith.constant 5 : index
    %c0_31 = arith.constant 0 : index
    %c0_32 = arith.constant 0 : index
    %26 = vector.load %arg3[%c5_30, %c0_31, %c0_32] : memref<9x4x4xbf16, #tpu.memory_space<vmem>>, vector<1x4x4xbf16>
    %27 = vector.shape_cast %26 : vector<1x4x4xbf16> to vector<4x4xbf16>
    %c6_33 = arith.constant 6 : index
    %c0_34 = arith.constant 0 : index
    %c0_35 = arith.constant 0 : index
    %28 = vector.load %arg3[%c6_33, %c0_34, %c0_35] : memref<9x4x4xbf16, #tpu.memory_space<vmem>>, vector<1x4x4xbf16>
    %29 = vector.shape_cast %28 : vector<1x4x4xbf16> to vector<4x4xbf16>
    %c7_36 = arith.constant 7 : index
    %c0_37 = arith.constant 0 : index
    %c0_38 = arith.constant 0 : index
    %30 = vector.load %arg3[%c7_36, %c0_37, %c0_38] : memref<9x4x4xbf16, #tpu.memory_space<vmem>>, vector<1x4x4xbf16>
    %31 = vector.shape_cast %30 : vector<1x4x4xbf16> to vector<4x4xbf16>
    %c8_39 = arith.constant 8 : index
    %c0_40 = arith.constant 0 : index
    %c0_41 = arith.constant 0 : index
    %32 = vector.load %arg3[%c8_39, %c0_40, %c0_41] : memref<9x4x4xbf16, #tpu.memory_space<vmem>>, vector<1x4x4xbf16>
    %33 = vector.shape_cast %32 : vector<1x4x4xbf16> to vector<4x4xbf16>
    %c0_42 = arith.constant 0 : index
    %c0_43 = arith.constant 0 : index
    %c0_44 = arith.constant 0 : index
    %34 = vector.load %arg6[%c0_42, %c0_43, %c0_44] : memref<9x4x4xbf16, #tpu.memory_space<vmem>>, vector<1x4x4xbf16>
    %35 = vector.shape_cast %34 : vector<1x4x4xbf16> to vector<4x4xbf16>
    %c1_45 = arith.constant 1 : index
    %c0_46 = arith.constant 0 : index
    %c0_47 = arith.constant 0 : index
    %36 = vector.load %arg6[%c1_45, %c0_46, %c0_47] : memref<9x4x4xbf16, #tpu.memory_space<vmem>>, vector<1x4x4xbf16>
    %37 = vector.shape_cast %36 : vector<1x4x4xbf16> to vector<4x4xbf16>
    %c2_48 = arith.constant 2 : index
    %c0_49 = arith.constant 0 : index
    %c0_50 = arith.constant 0 : index
    %38 = vector.load %arg6[%c2_48, %c0_49, %c0_50] : memref<9x4x4xbf16, #tpu.memory_space<vmem>>, vector<1x4x4xbf16>
    %39 = vector.shape_cast %38 : vector<1x4x4xbf16> to vector<4x4xbf16>
    %c3_51 = arith.constant 3 : index
    %c0_52 = arith.constant 0 : index
    %c0_53 = arith.constant 0 : index
    %40 = vector.load %arg6[%c3_51, %c0_52, %c0_53] : memref<9x4x4xbf16, #tpu.memory_space<vmem>>, vector<1x4x4xbf16>
    %41 = vector.shape_cast %40 : vector<1x4x4xbf16> to vector<4x4xbf16>
    %c4_54 = arith.constant 4 : index
    %c0_55 = arith.constant 0 : index
    %c0_56 = arith.constant 0 : index
    %42 = vector.load %arg6[%c4_54, %c0_55, %c0_56] : memref<9x4x4xbf16, #tpu.memory_space<vmem>>, vector<1x4x4xbf16>
    %43 = vector.shape_cast %42 : vector<1x4x4xbf16> to vector<4x4xbf16>
    %c5_57 = arith.constant 5 : index
    %c0_58 = arith.constant 0 : index
    %c0_59 = arith.constant 0 : index
    %44 = vector.load %arg6[%c5_57, %c0_58, %c0_59] : memref<9x4x4xbf16, #tpu.memory_space<vmem>>, vector<1x4x4xbf16>
    %45 = vector.shape_cast %44 : vector<1x4x4xbf16> to vector<4x4xbf16>
    %c6_60 = arith.constant 6 : index
    %c0_61 = arith.constant 0 : index
    %c0_62 = arith.constant 0 : index
    %46 = vector.load %arg6[%c6_60, %c0_61, %c0_62] : memref<9x4x4xbf16, #tpu.memory_space<vmem>>, vector<1x4x4xbf16>
    %47 = vector.shape_cast %46 : vector<1x4x4xbf16> to vector<4x4xbf16>
    %c7_63 = arith.constant 7 : index
    %c0_64 = arith.constant 0 : index
    %c0_65 = arith.constant 0 : index
    %48 = vector.load %arg6[%c7_63, %c0_64, %c0_65] : memref<9x4x4xbf16, #tpu.memory_space<vmem>>, vector<1x4x4xbf16>
    %49 = vector.shape_cast %48 : vector<1x4x4xbf16> to vector<4x4xbf16>
    %c8_66 = arith.constant 8 : index
    %c0_67 = arith.constant 0 : index
    %c0_68 = arith.constant 0 : index
    %50 = vector.load %arg6[%c8_66, %c0_67, %c0_68] : memref<9x4x4xbf16, #tpu.memory_space<vmem>>, vector<1x4x4xbf16>
    %51 = vector.shape_cast %50 : vector<1x4x4xbf16> to vector<4x4xbf16>
    %c0_69 = arith.constant 0 : index
    %c0_70 = arith.constant 0 : index
    %52 = vector.load %arg4[%c0_69, %c0_70] : memref<4x1xf32, #tpu.memory_space<vmem>>, vector<4x1xf32>
    %c0_71 = arith.constant 0 : index
    %c0_72 = arith.constant 0 : index
    %53 = vector.load %arg5[%c0_71, %c0_72] : memref<4x1xf32, #tpu.memory_space<vmem>>, vector<4x1xf32>
    %c0_73 = arith.constant 0 : index
    %c0_74 = arith.constant 0 : index
    %54 = vector.load %arg7[%c0_73, %c0_74] : memref<4x1xf32, #tpu.memory_space<vmem>>, vector<4x1xf32>
    %c0_75 = arith.constant 0 : index
    %c0_76 = arith.constant 0 : index
    %55 = vector.load %arg8[%c0_75, %c0_76] : memref<4x1xf32, #tpu.memory_space<vmem>>, vector<4x1xf32>
    %c0_77 = arith.constant 0 : index
    %c0_78 = arith.constant 0 : index
    %c0_79 = arith.constant 0 : index
    %56 = vector.load %arg1[%c0_77, %c0_78, %c0_79] : memref<2x4x256xf32, #tpu.memory_space<vmem>>, vector<1x4x256xf32>
    %57 = vector.shape_cast %56 : vector<1x4x256xf32> to vector<4x256xf32>
    %c17_i32 = arith.constant 17 : i32
    %58 = tpu.dynamic_rotate %57 by %c17_i32 dim 1 : vector<4x256xf32>, i32 -> vector<4x256xf32>
    %59 = arith.mulf %58, %1 : vector<4x256xf32>
    %60 = arith.truncf %59 : vector<4x256xf32> to vector<4x256xbf16>
    %cst = arith.constant dense<0.000000e+00> : vector<4x256xf32>
    %61 = tpu.matmul %17, %60, %cst {dimension_numbers = #tpu.dot_dimension_numbers<[1], [0], [0], [1], [0, 0, 1, 1], [], []>} : vector<4x4xbf16>, vector<4x256xbf16>, vector<4x256xf32> -> vector<4x256xf32>
    %c16_i32 = arith.constant 16 : i32
    %62 = tpu.dynamic_rotate %57 by %c16_i32 dim 1 : vector<4x256xf32>, i32 -> vector<4x256xf32>
    %63 = arith.mulf %62, %3 : vector<4x256xf32>
    %64 = arith.truncf %63 : vector<4x256xf32> to vector<4x256xbf16>
    %cst_80 = arith.constant dense<0.000000e+00> : vector<4x256xf32>
    %65 = tpu.matmul %19, %64, %cst_80 {dimension_numbers = #tpu.dot_dimension_numbers<[1], [0], [0], [1], [0, 0, 1, 1], [], []>} : vector<4x4xbf16>, vector<4x256xbf16>, vector<4x256xf32> -> vector<4x256xf32>
    %66 = arith.addf %61, %65 : vector<4x256xf32>
    %c15_i32 = arith.constant 15 : i32
    %67 = tpu.dynamic_rotate %57 by %c15_i32 dim 1 : vector<4x256xf32>, i32 -> vector<4x256xf32>
    %68 = arith.mulf %67, %5 : vector<4x256xf32>
    %69 = arith.truncf %68 : vector<4x256xf32> to vector<4x256xbf16>
    %cst_81 = arith.constant dense<0.000000e+00> : vector<4x256xf32>
    %70 = tpu.matmul %21, %69, %cst_81 {dimension_numbers = #tpu.dot_dimension_numbers<[1], [0], [0], [1], [0, 0, 1, 1], [], []>} : vector<4x4xbf16>, vector<4x256xbf16>, vector<4x256xf32> -> vector<4x256xf32>
    %71 = arith.addf %66, %70 : vector<4x256xf32>
    %c1_i32 = arith.constant 1 : i32
    %72 = tpu.dynamic_rotate %57 by %c1_i32 dim 1 : vector<4x256xf32>, i32 -> vector<4x256xf32>
    %73 = arith.mulf %72, %7 : vector<4x256xf32>
    %74 = arith.truncf %73 : vector<4x256xf32> to vector<4x256xbf16>
    %cst_82 = arith.constant dense<0.000000e+00> : vector<4x256xf32>
    %75 = tpu.matmul %23, %74, %cst_82 {dimension_numbers = #tpu.dot_dimension_numbers<[1], [0], [0], [1], [0, 0, 1, 1], [], []>} : vector<4x4xbf16>, vector<4x256xbf16>, vector<4x256xf32> -> vector<4x256xf32>
    %76 = arith.addf %71, %75 : vector<4x256xf32>
    %77 = arith.truncf %57 : vector<4x256xf32> to vector<4x256xbf16>
    %cst_83 = arith.constant dense<0.000000e+00> : vector<4x256xf32>
    %78 = tpu.matmul %25, %77, %cst_83 {dimension_numbers = #tpu.dot_dimension_numbers<[1], [0], [0], [1], [0, 0, 1, 1], [], []>} : vector<4x4xbf16>, vector<4x256xbf16>, vector<4x256xf32> -> vector<4x256xf32>
    %79 = arith.addf %76, %78 : vector<4x256xf32>
    %c255_i32 = arith.constant 255 : i32
    %80 = tpu.dynamic_rotate %57 by %c255_i32 dim 1 : vector<4x256xf32>, i32 -> vector<4x256xf32>
    %81 = arith.mulf %80, %9 : vector<4x256xf32>
    %82 = arith.truncf %81 : vector<4x256xf32> to vector<4x256xbf16>
    %cst_84 = arith.constant dense<0.000000e+00> : vector<4x256xf32>
    %83 = tpu.matmul %27, %82, %cst_84 {dimension_numbers = #tpu.dot_dimension_numbers<[1], [0], [0], [1], [0, 0, 1, 1], [], []>} : vector<4x4xbf16>, vector<4x256xbf16>, vector<4x256xf32> -> vector<4x256xf32>
    %84 = arith.addf %79, %83 : vector<4x256xf32>
    %c241_i32 = arith.constant 241 : i32
    %85 = tpu.dynamic_rotate %57 by %c241_i32 dim 1 : vector<4x256xf32>, i32 -> vector<4x256xf32>
    %86 = arith.mulf %85, %11 : vector<4x256xf32>
    %87 = arith.truncf %86 : vector<4x256xf32> to vector<4x256xbf16>
    %cst_85 = arith.constant dense<0.000000e+00> : vector<4x256xf32>
    %88 = tpu.matmul %29, %87, %cst_85 {dimension_numbers = #tpu.dot_dimension_numbers<[1], [0], [0], [1], [0, 0, 1, 1], [], []>} : vector<4x4xbf16>, vector<4x256xbf16>, vector<4x256xf32> -> vector<4x256xf32>
    %89 = arith.addf %84, %88 : vector<4x256xf32>
    %c240_i32 = arith.constant 240 : i32
    %90 = tpu.dynamic_rotate %57 by %c240_i32 dim 1 : vector<4x256xf32>, i32 -> vector<4x256xf32>
    %91 = arith.mulf %90, %13 : vector<4x256xf32>
    %92 = arith.truncf %91 : vector<4x256xf32> to vector<4x256xbf16>
    %cst_86 = arith.constant dense<0.000000e+00> : vector<4x256xf32>
    %93 = tpu.matmul %31, %92, %cst_86 {dimension_numbers = #tpu.dot_dimension_numbers<[1], [0], [0], [1], [0, 0, 1, 1], [], []>} : vector<4x4xbf16>, vector<4x256xbf16>, vector<4x256xf32> -> vector<4x256xf32>
    %94 = arith.addf %89, %93 : vector<4x256xf32>
    %c239_i32 = arith.constant 239 : i32
    %95 = tpu.dynamic_rotate %57 by %c239_i32 dim 1 : vector<4x256xf32>, i32 -> vector<4x256xf32>
    %96 = arith.mulf %95, %15 : vector<4x256xf32>
    %97 = arith.truncf %96 : vector<4x256xf32> to vector<4x256xbf16>
    %cst_87 = arith.constant dense<0.000000e+00> : vector<4x256xf32>
    %98 = tpu.matmul %33, %97, %cst_87 {dimension_numbers = #tpu.dot_dimension_numbers<[1], [0], [0], [1], [0, 0, 1, 1], [], []>} : vector<4x4xbf16>, vector<4x256xbf16>, vector<4x256xf32> -> vector<4x256xf32>
    %99 = arith.addf %94, %98 : vector<4x256xf32>
    %100 = vector.broadcast %52 : vector<4x1xf32> to vector<4x256xf32>
    %101 = arith.mulf %99, %100 : vector<4x256xf32>
    %102 = vector.broadcast %53 : vector<4x1xf32> to vector<4x256xf32>
    %103 = arith.addf %101, %102 : vector<4x256xf32>
    %cst_88 = arith.constant 0.000000e+00 : f32
    %104 = vector.broadcast %cst_88 : f32 to vector<4x256xf32>
    %105 = arith.maximumf %103, %104 : vector<4x256xf32>
    %c17_i32_89 = arith.constant 17 : i32
    %106 = tpu.dynamic_rotate %105 by %c17_i32_89 dim 1 : vector<4x256xf32>, i32 -> vector<4x256xf32>
    %107 = arith.mulf %106, %1 : vector<4x256xf32>
    %108 = arith.truncf %107 : vector<4x256xf32> to vector<4x256xbf16>
    %cst_90 = arith.constant dense<0.000000e+00> : vector<4x256xf32>
    %109 = tpu.matmul %35, %108, %cst_90 {dimension_numbers = #tpu.dot_dimension_numbers<[1], [0], [0], [1], [0, 0, 1, 1], [], []>} : vector<4x4xbf16>, vector<4x256xbf16>, vector<4x256xf32> -> vector<4x256xf32>
    %c16_i32_91 = arith.constant 16 : i32
    %110 = tpu.dynamic_rotate %105 by %c16_i32_91 dim 1 : vector<4x256xf32>, i32 -> vector<4x256xf32>
    %111 = arith.mulf %110, %3 : vector<4x256xf32>
    %112 = arith.truncf %111 : vector<4x256xf32> to vector<4x256xbf16>
    %cst_92 = arith.constant dense<0.000000e+00> : vector<4x256xf32>
    %113 = tpu.matmul %37, %112, %cst_92 {dimension_numbers = #tpu.dot_dimension_numbers<[1], [0], [0], [1], [0, 0, 1, 1], [], []>} : vector<4x4xbf16>, vector<4x256xbf16>, vector<4x256xf32> -> vector<4x256xf32>
    %114 = arith.addf %109, %113 : vector<4x256xf32>
    %c15_i32_93 = arith.constant 15 : i32
    %115 = tpu.dynamic_rotate %105 by %c15_i32_93 dim 1 : vector<4x256xf32>, i32 -> vector<4x256xf32>
    %116 = arith.mulf %115, %5 : vector<4x256xf32>
    %117 = arith.truncf %116 : vector<4x256xf32> to vector<4x256xbf16>
    %cst_94 = arith.constant dense<0.000000e+00> : vector<4x256xf32>
    %118 = tpu.matmul %39, %117, %cst_94 {dimension_numbers = #tpu.dot_dimension_numbers<[1], [0], [0], [1], [0, 0, 1, 1], [], []>} : vector<4x4xbf16>, vector<4x256xbf16>, vector<4x256xf32> -> vector<4x256xf32>
    %119 = arith.addf %114, %118 : vector<4x256xf32>
    %c1_i32_95 = arith.constant 1 : i32
    %120 = tpu.dynamic_rotate %105 by %c1_i32_95 dim 1 : vector<4x256xf32>, i32 -> vector<4x256xf32>
    %121 = arith.mulf %120, %7 : vector<4x256xf32>
    %122 = arith.truncf %121 : vector<4x256xf32> to vector<4x256xbf16>
    %cst_96 = arith.constant dense<0.000000e+00> : vector<4x256xf32>
    %123 = tpu.matmul %41, %122, %cst_96 {dimension_numbers = #tpu.dot_dimension_numbers<[1], [0], [0], [1], [0, 0, 1, 1], [], []>} : vector<4x4xbf16>, vector<4x256xbf16>, vector<4x256xf32> -> vector<4x256xf32>
    %124 = arith.addf %119, %123 : vector<4x256xf32>
    %125 = arith.truncf %105 : vector<4x256xf32> to vector<4x256xbf16>
    %cst_97 = arith.constant dense<0.000000e+00> : vector<4x256xf32>
    %126 = tpu.matmul %43, %125, %cst_97 {dimension_numbers = #tpu.dot_dimension_numbers<[1], [0], [0], [1], [0, 0, 1, 1], [], []>} : vector<4x4xbf16>, vector<4x256xbf16>, vector<4x256xf32> -> vector<4x256xf32>
    %127 = arith.addf %124, %126 : vector<4x256xf32>
    %c255_i32_98 = arith.constant 255 : i32
    %128 = tpu.dynamic_rotate %105 by %c255_i32_98 dim 1 : vector<4x256xf32>, i32 -> vector<4x256xf32>
    %129 = arith.mulf %128, %9 : vector<4x256xf32>
    %130 = arith.truncf %129 : vector<4x256xf32> to vector<4x256xbf16>
    %cst_99 = arith.constant dense<0.000000e+00> : vector<4x256xf32>
    %131 = tpu.matmul %45, %130, %cst_99 {dimension_numbers = #tpu.dot_dimension_numbers<[1], [0], [0], [1], [0, 0, 1, 1], [], []>} : vector<4x4xbf16>, vector<4x256xbf16>, vector<4x256xf32> -> vector<4x256xf32>
    %132 = arith.addf %127, %131 : vector<4x256xf32>
    %c241_i32_100 = arith.constant 241 : i32
    %133 = tpu.dynamic_rotate %105 by %c241_i32_100 dim 1 : vector<4x256xf32>, i32 -> vector<4x256xf32>
    %134 = arith.mulf %133, %11 : vector<4x256xf32>
    %135 = arith.truncf %134 : vector<4x256xf32> to vector<4x256xbf16>
    %cst_101 = arith.constant dense<0.000000e+00> : vector<4x256xf32>
    %136 = tpu.matmul %47, %135, %cst_101 {dimension_numbers = #tpu.dot_dimension_numbers<[1], [0], [0], [1], [0, 0, 1, 1], [], []>} : vector<4x4xbf16>, vector<4x256xbf16>, vector<4x256xf32> -> vector<4x256xf32>
    %137 = arith.addf %132, %136 : vector<4x256xf32>
    %c240_i32_102 = arith.constant 240 : i32
    %138 = tpu.dynamic_rotate %105 by %c240_i32_102 dim 1 : vector<4x256xf32>, i32 -> vector<4x256xf32>
    %139 = arith.mulf %138, %13 : vector<4x256xf32>
    %140 = arith.truncf %139 : vector<4x256xf32> to vector<4x256xbf16>
    %cst_103 = arith.constant dense<0.000000e+00> : vector<4x256xf32>
    %141 = tpu.matmul %49, %140, %cst_103 {dimension_numbers = #tpu.dot_dimension_numbers<[1], [0], [0], [1], [0, 0, 1, 1], [], []>} : vector<4x4xbf16>, vector<4x256xbf16>, vector<4x256xf32> -> vector<4x256xf32>
    %142 = arith.addf %137, %141 : vector<4x256xf32>
    %c239_i32_104 = arith.constant 239 : i32
    %143 = tpu.dynamic_rotate %105 by %c239_i32_104 dim 1 : vector<4x256xf32>, i32 -> vector<4x256xf32>
    %144 = arith.mulf %143, %15 : vector<4x256xf32>
    %145 = arith.truncf %144 : vector<4x256xf32> to vector<4x256xbf16>
    %cst_105 = arith.constant dense<0.000000e+00> : vector<4x256xf32>
    %146 = tpu.matmul %51, %145, %cst_105 {dimension_numbers = #tpu.dot_dimension_numbers<[1], [0], [0], [1], [0, 0, 1, 1], [], []>} : vector<4x4xbf16>, vector<4x256xbf16>, vector<4x256xf32> -> vector<4x256xf32>
    %147 = arith.addf %142, %146 : vector<4x256xf32>
    %148 = vector.broadcast %54 : vector<4x1xf32> to vector<4x256xf32>
    %149 = arith.mulf %147, %148 : vector<4x256xf32>
    %150 = vector.broadcast %55 : vector<4x1xf32> to vector<4x256xf32>
    %151 = arith.addf %149, %150 : vector<4x256xf32>
    %152 = arith.addf %151, %57 : vector<4x256xf32>
    %cst_106 = arith.constant 0.000000e+00 : f32
    %153 = vector.broadcast %cst_106 : f32 to vector<4x256xf32>
    %154 = arith.maximumf %152, %153 : vector<4x256xf32>
    %c0_107 = arith.constant 0 : index
    %c0_108 = arith.constant 0 : index
    %c0_109 = arith.constant 0 : index
    %155 = vector.load %arg9[%c0_107, %c0_108, %c0_109] : memref<2x4x256xf32, #tpu.memory_space<vmem>>, vector<1x4x256xf32>
    %156 = vector.shape_cast %155 : vector<1x4x256xf32> to vector<4x256xf32>
    %157 = vector.shape_cast %154 : vector<4x256xf32> to vector<1x4x256xf32>
    tpu.vector_store %arg9[%c0_107, %c0_108, %c0_109], %157 {strides = array<i32>} : memref<2x4x256xf32, #tpu.memory_space<vmem>>, vector<1x4x256xf32>,
    %c1_110 = arith.constant 1 : index
    %c0_111 = arith.constant 0 : index
    %c0_112 = arith.constant 0 : index
    %158 = vector.load %arg1[%c1_110, %c0_111, %c0_112] : memref<2x4x256xf32, #tpu.memory_space<vmem>>, vector<1x4x256xf32>
    %159 = vector.shape_cast %158 : vector<1x4x256xf32> to vector<4x256xf32>
    %c17_i32_113 = arith.constant 17 : i32
    %160 = tpu.dynamic_rotate %159 by %c17_i32_113 dim 1 : vector<4x256xf32>, i32 -> vector<4x256xf32>
    %161 = arith.mulf %160, %1 : vector<4x256xf32>
    %162 = arith.truncf %161 : vector<4x256xf32> to vector<4x256xbf16>
    %cst_114 = arith.constant dense<0.000000e+00> : vector<4x256xf32>
    %163 = tpu.matmul %17, %162, %cst_114 {dimension_numbers = #tpu.dot_dimension_numbers<[1], [0], [0], [1], [0, 0, 1, 1], [], []>} : vector<4x4xbf16>, vector<4x256xbf16>, vector<4x256xf32> -> vector<4x256xf32>
    %c16_i32_115 = arith.constant 16 : i32
    %164 = tpu.dynamic_rotate %159 by %c16_i32_115 dim 1 : vector<4x256xf32>, i32 -> vector<4x256xf32>
    %165 = arith.mulf %164, %3 : vector<4x256xf32>
    %166 = arith.truncf %165 : vector<4x256xf32> to vector<4x256xbf16>
    %cst_116 = arith.constant dense<0.000000e+00> : vector<4x256xf32>
    %167 = tpu.matmul %19, %166, %cst_116 {dimension_numbers = #tpu.dot_dimension_numbers<[1], [0], [0], [1], [0, 0, 1, 1], [], []>} : vector<4x4xbf16>, vector<4x256xbf16>, vector<4x256xf32> -> vector<4x256xf32>
    %168 = arith.addf %163, %167 : vector<4x256xf32>
    %c15_i32_117 = arith.constant 15 : i32
    %169 = tpu.dynamic_rotate %159 by %c15_i32_117 dim 1 : vector<4x256xf32>, i32 -> vector<4x256xf32>
    %170 = arith.mulf %169, %5 : vector<4x256xf32>
    %171 = arith.truncf %170 : vector<4x256xf32> to vector<4x256xbf16>
    %cst_118 = arith.constant dense<0.000000e+00> : vector<4x256xf32>
    %172 = tpu.matmul %21, %171, %cst_118 {dimension_numbers = #tpu.dot_dimension_numbers<[1], [0], [0], [1], [0, 0, 1, 1], [], []>} : vector<4x4xbf16>, vector<4x256xbf16>, vector<4x256xf32> -> vector<4x256xf32>
    %173 = arith.addf %168, %172 : vector<4x256xf32>
    %c1_i32_119 = arith.constant 1 : i32
    %174 = tpu.dynamic_rotate %159 by %c1_i32_119 dim 1 : vector<4x256xf32>, i32 -> vector<4x256xf32>
    %175 = arith.mulf %174, %7 : vector<4x256xf32>
    %176 = arith.truncf %175 : vector<4x256xf32> to vector<4x256xbf16>
    %cst_120 = arith.constant dense<0.000000e+00> : vector<4x256xf32>
    %177 = tpu.matmul %23, %176, %cst_120 {dimension_numbers = #tpu.dot_dimension_numbers<[1], [0], [0], [1], [0, 0, 1, 1], [], []>} : vector<4x4xbf16>, vector<4x256xbf16>, vector<4x256xf32> -> vector<4x256xf32>
    %178 = arith.addf %173, %177 : vector<4x256xf32>
    %179 = arith.truncf %159 : vector<4x256xf32> to vector<4x256xbf16>
    %cst_121 = arith.constant dense<0.000000e+00> : vector<4x256xf32>
    %180 = tpu.matmul %25, %179, %cst_121 {dimension_numbers = #tpu.dot_dimension_numbers<[1], [0], [0], [1], [0, 0, 1, 1], [], []>} : vector<4x4xbf16>, vector<4x256xbf16>, vector<4x256xf32> -> vector<4x256xf32>
    %181 = arith.addf %178, %180 : vector<4x256xf32>
    %c255_i32_122 = arith.constant 255 : i32
    %182 = tpu.dynamic_rotate %159 by %c255_i32_122 dim 1 : vector<4x256xf32>, i32 -> vector<4x256xf32>
    %183 = arith.mulf %182, %9 : vector<4x256xf32>
    %184 = arith.truncf %183 : vector<4x256xf32> to vector<4x256xbf16>
    %cst_123 = arith.constant dense<0.000000e+00> : vector<4x256xf32>
    %185 = tpu.matmul %27, %184, %cst_123 {dimension_numbers = #tpu.dot_dimension_numbers<[1], [0], [0], [1], [0, 0, 1, 1], [], []>} : vector<4x4xbf16>, vector<4x256xbf16>, vector<4x256xf32> -> vector<4x256xf32>
    %186 = arith.addf %181, %185 : vector<4x256xf32>
    %c241_i32_124 = arith.constant 241 : i32
    %187 = tpu.dynamic_rotate %159 by %c241_i32_124 dim 1 : vector<4x256xf32>, i32 -> vector<4x256xf32>
    %188 = arith.mulf %187, %11 : vector<4x256xf32>
    %189 = arith.truncf %188 : vector<4x256xf32> to vector<4x256xbf16>
    %cst_125 = arith.constant dense<0.000000e+00> : vector<4x256xf32>
    %190 = tpu.matmul %29, %189, %cst_125 {dimension_numbers = #tpu.dot_dimension_numbers<[1], [0], [0], [1], [0, 0, 1, 1], [], []>} : vector<4x4xbf16>, vector<4x256xbf16>, vector<4x256xf32> -> vector<4x256xf32>
    %191 = arith.addf %186, %190 : vector<4x256xf32>
    %c240_i32_126 = arith.constant 240 : i32
    %192 = tpu.dynamic_rotate %159 by %c240_i32_126 dim 1 : vector<4x256xf32>, i32 -> vector<4x256xf32>
    %193 = arith.mulf %192, %13 : vector<4x256xf32>
    %194 = arith.truncf %193 : vector<4x256xf32> to vector<4x256xbf16>
    %cst_127 = arith.constant dense<0.000000e+00> : vector<4x256xf32>
    %195 = tpu.matmul %31, %194, %cst_127 {dimension_numbers = #tpu.dot_dimension_numbers<[1], [0], [0], [1], [0, 0, 1, 1], [], []>} : vector<4x4xbf16>, vector<4x256xbf16>, vector<4x256xf32> -> vector<4x256xf32>
    %196 = arith.addf %191, %195 : vector<4x256xf32>
    %c239_i32_128 = arith.constant 239 : i32
    %197 = tpu.dynamic_rotate %159 by %c239_i32_128 dim 1 : vector<4x256xf32>, i32 -> vector<4x256xf32>
    %198 = arith.mulf %197, %15 : vector<4x256xf32>
    %199 = arith.truncf %198 : vector<4x256xf32> to vector<4x256xbf16>
    %cst_129 = arith.constant dense<0.000000e+00> : vector<4x256xf32>
    %200 = tpu.matmul %33, %199, %cst_129 {dimension_numbers = #tpu.dot_dimension_numbers<[1], [0], [0], [1], [0, 0, 1, 1], [], []>} : vector<4x4xbf16>, vector<4x256xbf16>, vector<4x256xf32> -> vector<4x256xf32>
    %201 = arith.addf %196, %200 : vector<4x256xf32>
    %202 = vector.broadcast %52 : vector<4x1xf32> to vector<4x256xf32>
    %203 = arith.mulf %201, %202 : vector<4x256xf32>
    %204 = vector.broadcast %53 : vector<4x1xf32> to vector<4x256xf32>
    %205 = arith.addf %203, %204 : vector<4x256xf32>
    %cst_130 = arith.constant 0.000000e+00 : f32
    %206 = vector.broadcast %cst_130 : f32 to vector<4x256xf32>
    %207 = arith.maximumf %205, %206 : vector<4x256xf32>
    %c17_i32_131 = arith.constant 17 : i32
    %208 = tpu.dynamic_rotate %207 by %c17_i32_131 dim 1 : vector<4x256xf32>, i32 -> vector<4x256xf32>
    %209 = arith.mulf %208, %1 : vector<4x256xf32>
    %210 = arith.truncf %209 : vector<4x256xf32> to vector<4x256xbf16>
    %cst_132 = arith.constant dense<0.000000e+00> : vector<4x256xf32>
    %211 = tpu.matmul %35, %210, %cst_132 {dimension_numbers = #tpu.dot_dimension_numbers<[1], [0], [0], [1], [0, 0, 1, 1], [], []>} : vector<4x4xbf16>, vector<4x256xbf16>, vector<4x256xf32> -> vector<4x256xf32>
    %c16_i32_133 = arith.constant 16 : i32
    %212 = tpu.dynamic_rotate %207 by %c16_i32_133 dim 1 : vector<4x256xf32>, i32 -> vector<4x256xf32>
    %213 = arith.mulf %212, %3 : vector<4x256xf32>
    %214 = arith.truncf %213 : vector<4x256xf32> to vector<4x256xbf16>
    %cst_134 = arith.constant dense<0.000000e+00> : vector<4x256xf32>
    %215 = tpu.matmul %37, %214, %cst_134 {dimension_numbers = #tpu.dot_dimension_numbers<[1], [0], [0], [1], [0, 0, 1, 1], [], []>} : vector<4x4xbf16>, vector<4x256xbf16>, vector<4x256xf32> -> vector<4x256xf32>
    %216 = arith.addf %211, %215 : vector<4x256xf32>
    %c15_i32_135 = arith.constant 15 : i32
    %217 = tpu.dynamic_rotate %207 by %c15_i32_135 dim 1 : vector<4x256xf32>, i32 -> vector<4x256xf32>
    %218 = arith.mulf %217, %5 : vector<4x256xf32>
    %219 = arith.truncf %218 : vector<4x256xf32> to vector<4x256xbf16>
    %cst_136 = arith.constant dense<0.000000e+00> : vector<4x256xf32>
    %220 = tpu.matmul %39, %219, %cst_136 {dimension_numbers = #tpu.dot_dimension_numbers<[1], [0], [0], [1], [0, 0, 1, 1], [], []>} : vector<4x4xbf16>, vector<4x256xbf16>, vector<4x256xf32> -> vector<4x256xf32>
    %221 = arith.addf %216, %220 : vector<4x256xf32>
    %c1_i32_137 = arith.constant 1 : i32
    %222 = tpu.dynamic_rotate %207 by %c1_i32_137 dim 1 : vector<4x256xf32>, i32 -> vector<4x256xf32>
    %223 = arith.mulf %222, %7 : vector<4x256xf32>
    %224 = arith.truncf %223 : vector<4x256xf32> to vector<4x256xbf16>
    %cst_138 = arith.constant dense<0.000000e+00> : vector<4x256xf32>
    %225 = tpu.matmul %41, %224, %cst_138 {dimension_numbers = #tpu.dot_dimension_numbers<[1], [0], [0], [1], [0, 0, 1, 1], [], []>} : vector<4x4xbf16>, vector<4x256xbf16>, vector<4x256xf32> -> vector<4x256xf32>
    %226 = arith.addf %221, %225 : vector<4x256xf32>
    %227 = arith.truncf %207 : vector<4x256xf32> to vector<4x256xbf16>
    %cst_139 = arith.constant dense<0.000000e+00> : vector<4x256xf32>
    %228 = tpu.matmul %43, %227, %cst_139 {dimension_numbers = #tpu.dot_dimension_numbers<[1], [0], [0], [1], [0, 0, 1, 1], [], []>} : vector<4x4xbf16>, vector<4x256xbf16>, vector<4x256xf32> -> vector<4x256xf32>
    %229 = arith.addf %226, %228 : vector<4x256xf32>
    %c255_i32_140 = arith.constant 255 : i32
    %230 = tpu.dynamic_rotate %207 by %c255_i32_140 dim 1 : vector<4x256xf32>, i32 -> vector<4x256xf32>
    %231 = arith.mulf %230, %9 : vector<4x256xf32>
    %232 = arith.truncf %231 : vector<4x256xf32> to vector<4x256xbf16>
    %cst_141 = arith.constant dense<0.000000e+00> : vector<4x256xf32>
    %233 = tpu.matmul %45, %232, %cst_141 {dimension_numbers = #tpu.dot_dimension_numbers<[1], [0], [0], [1], [0, 0, 1, 1], [], []>} : vector<4x4xbf16>, vector<4x256xbf16>, vector<4x256xf32> -> vector<4x256xf32>
    %234 = arith.addf %229, %233 : vector<4x256xf32>
    %c241_i32_142 = arith.constant 241 : i32
    %235 = tpu.dynamic_rotate %207 by %c241_i32_142 dim 1 : vector<4x256xf32>, i32 -> vector<4x256xf32>
    %236 = arith.mulf %235, %11 : vector<4x256xf32>
    %237 = arith.truncf %236 : vector<4x256xf32> to vector<4x256xbf16>
    %cst_143 = arith.constant dense<0.000000e+00> : vector<4x256xf32>
    %238 = tpu.matmul %47, %237, %cst_143 {dimension_numbers = #tpu.dot_dimension_numbers<[1], [0], [0], [1], [0, 0, 1, 1], [], []>} : vector<4x4xbf16>, vector<4x256xbf16>, vector<4x256xf32> -> vector<4x256xf32>
    %239 = arith.addf %234, %238 : vector<4x256xf32>
    %c240_i32_144 = arith.constant 240 : i32
    %240 = tpu.dynamic_rotate %207 by %c240_i32_144 dim 1 : vector<4x256xf32>, i32 -> vector<4x256xf32>
    %241 = arith.mulf %240, %13 : vector<4x256xf32>
    %242 = arith.truncf %241 : vector<4x256xf32> to vector<4x256xbf16>
    %cst_145 = arith.constant dense<0.000000e+00> : vector<4x256xf32>
    %243 = tpu.matmul %49, %242, %cst_145 {dimension_numbers = #tpu.dot_dimension_numbers<[1], [0], [0], [1], [0, 0, 1, 1], [], []>} : vector<4x4xbf16>, vector<4x256xbf16>, vector<4x256xf32> -> vector<4x256xf32>
    %244 = arith.addf %239, %243 : vector<4x256xf32>
    %c239_i32_146 = arith.constant 239 : i32
    %245 = tpu.dynamic_rotate %207 by %c239_i32_146 dim 1 : vector<4x256xf32>, i32 -> vector<4x256xf32>
    %246 = arith.mulf %245, %15 : vector<4x256xf32>
    %247 = arith.truncf %246 : vector<4x256xf32> to vector<4x256xbf16>
    %cst_147 = arith.constant dense<0.000000e+00> : vector<4x256xf32>
    %248 = tpu.matmul %51, %247, %cst_147 {dimension_numbers = #tpu.dot_dimension_numbers<[1], [0], [0], [1], [0, 0, 1, 1], [], []>} : vector<4x4xbf16>, vector<4x256xbf16>, vector<4x256xf32> -> vector<4x256xf32>
    %249 = arith.addf %244, %248 : vector<4x256xf32>
    %250 = vector.broadcast %54 : vector<4x1xf32> to vector<4x256xf32>
    %251 = arith.mulf %249, %250 : vector<4x256xf32>
    %252 = vector.broadcast %55 : vector<4x1xf32> to vector<4x256xf32>
    %253 = arith.addf %251, %252 : vector<4x256xf32>
    %254 = arith.addf %253, %159 : vector<4x256xf32>
    %cst_148 = arith.constant 0.000000e+00 : f32
    %255 = vector.broadcast %cst_148 : f32 to vector<4x256xf32>
    %256 = arith.maximumf %254, %255 : vector<4x256xf32>
    %c1_149 = arith.constant 1 : index
    %c0_150 = arith.constant 0 : index
    %c0_151 = arith.constant 0 : index
    %257 = vector.load %arg9[%c1_149, %c0_150, %c0_151] : memref<2x4x256xf32, #tpu.memory_space<vmem>>, vector<1x4x256xf32>
    %258 = vector.shape_cast %257 : vector<1x4x256xf32> to vector<4x256xf32>
    %259 = vector.shape_cast %256 : vector<4x256xf32> to vector<1x4x256xf32>
    tpu.vector_store %arg9[%c1_149, %c0_150, %c0_151], %259 {strides = array<i32>} : memref<2x4x256xf32, #tpu.memory_space<vmem>>, vector<1x4x256xf32>,
    return
  }
  func.func @transform_0(%arg0: i32) -> (i32, i32, i32) {
    %c0_i32 = arith.constant 0 : i32
    %c0_i32_0 = arith.constant 0 : i32
    %c0_i32_1 = arith.constant 0 : i32
    return %arg0, %c0_i32, %c0_i32_0 : i32, i32, i32
  }
  func.func @transform_1(%arg0: i32) -> (i32, i32, i32) {
    %c0_i32 = arith.constant 0 : i32
    %c0_i32_0 = arith.constant 0 : i32
    %c0_i32_1 = arith.constant 0 : i32
    %c0_i32_2 = arith.constant 0 : i32
    return %c0_i32, %c0_i32_0, %c0_i32_1 : i32, i32, i32
  }
  func.func @transform_2(%arg0: i32) -> (i32, i32, i32) {
    %c0_i32 = arith.constant 0 : i32
    %c0_i32_0 = arith.constant 0 : i32
    %c0_i32_1 = arith.constant 0 : i32
    %c0_i32_2 = arith.constant 0 : i32
    return %c0_i32, %c0_i32_0, %c0_i32_1 : i32, i32, i32
  }
  func.func @transform_3(%arg0: i32) -> (i32, i32) {
    %c0_i32 = arith.constant 0 : i32
    %c0_i32_0 = arith.constant 0 : i32
    %c0_i32_1 = arith.constant 0 : i32
    return %c0_i32, %c0_i32_0 : i32, i32
  }
  func.func @transform_4(%arg0: i32) -> (i32, i32) {
    %c0_i32 = arith.constant 0 : i32
    %c0_i32_0 = arith.constant 0 : i32
    %c0_i32_1 = arith.constant 0 : i32
    return %c0_i32, %c0_i32_0 : i32, i32
  }
  func.func @transform_5(%arg0: i32) -> (i32, i32, i32) {
    %c0_i32 = arith.constant 0 : i32
    %c0_i32_0 = arith.constant 0 : i32
    %c0_i32_1 = arith.constant 0 : i32
    %c0_i32_2 = arith.constant 0 : i32
    return %c0_i32, %c0_i32_0, %c0_i32_1 : i32, i32, i32
  }
  func.func @transform_6(%arg0: i32) -> (i32, i32) {
    %c0_i32 = arith.constant 0 : i32
    %c0_i32_0 = arith.constant 0 : i32
    %c0_i32_1 = arith.constant 0 : i32
    return %c0_i32, %c0_i32_0 : i32, i32
  }
  func.func @transform_7(%arg0: i32) -> (i32, i32) {
    %c0_i32 = arith.constant 0 : i32
    %c0_i32_0 = arith.constant 0 : i32
    %c0_i32_1 = arith.constant 0 : i32
    return %c0_i32, %c0_i32_0 : i32, i32
  }
  func.func @transform_8(%arg0: i32) -> (i32, i32, i32) {
    %c0_i32 = arith.constant 0 : i32
    %c0_i32_0 = arith.constant 0 : i32
    %c0_i32_1 = arith.constant 0 : i32
    return %arg0, %c0_i32, %c0_i32_0 : i32, i32, i32
  }
}

</mosaic_0001>

<llo_original>
// kernel: tpu_custom_call.1
$region0: #{tpu_custom_call.1}
  #allocation0 [shape = 'u32[]', space=smem, size = 0x4, offset = 0x4, fixed_abs, tag = 'smem constant byte address 0x4 - core index']
  #allocation1 [shape = 'u32[144,128]{1,0:T(1,128)}', space=vmem, size = 0x12000, scoped, tag = 'internal scratch']
  %s0 = inlined_call_operand.hbm [shape: f32[2,4,256], index: 0, kind: input, shape index: {}]
  %s1 = inlined_call_operand.vmem [shape: f32[9,4,256], index: 1, kind: input, shape index: {}]
  %s2 = inlined_call_operand.vmem [shape: bf16[9,4,4], index: 2, kind: input, shape index: {}]
  %s3 = inlined_call_operand.vmem [shape: f32[4,1], index: 3, kind: input, shape index: {}]
  %s4 = inlined_call_operand.vmem [shape: f32[4,1], index: 4, kind: input, shape index: {}]
  %s5 = inlined_call_operand.vmem [shape: bf16[9,4,4], index: 5, kind: input, shape index: {}]
  %s6 = inlined_call_operand.vmem [shape: f32[4,1], index: 6, kind: input, shape index: {}]
  %s7 = inlined_call_operand.vmem [shape: f32[4,1], index: 7, kind: input, shape index: {}]
  %s8 = inlined_call_operand.hbm [shape: f32[2,4,256], index: 8, kind: output, shape index: {}]
  %s9 = sld [smem:[#allocation0]]
  $region46: #{tpu_custom_call.1} parent=0
    _
  %s11 = ssub.s32 1, %s9
  %s12 = scalar_select 0, %s11, %s9
  $region1: #{tpu_custom_call.1} parent=0
    #allocation2 [shape = 'u8[8192]{0}', space=vmem, size = 0x2000, scoped, tag = 'input window, operand 0, single buffered']
    #allocation3 [shape = 's32[1]{0}', space=sflag, size = 0x4, scoped, tag = 'scoped memory for tpu_custom_call.1']
    #allocation4 [shape = 's32[1]{0}', space=sflag, size = 0x4, scoped, tag = 'scoped memory for tpu_custom_call.1']
    #allocation5 [shape = 'u8[8192]{0}', space=vmem, size = 0x2000, scoped, tag = 'output window, operand 0, single buffered']
    %13 = vsyncpa [#allocation3], 0
    %14 = vsyncpa [#allocation4], 0
    // Predicated region
    $region2: #{tpu_custom_call.1} parent=1 // pred_check
      _
    $region3: #{tpu_custom_call.1} parent=1 // pred_check_branch
      %16 = sbr.rel (0) target = $region5
    $region4: #{tpu_custom_call.1} parent=1 // pred_region
      %s18 = ssub.s32 256, 256
      %19 = vsyncadd [#allocation3], %s18
      %s20 = sshll.u32 [#allocation2], 4
      %s21 = int_to_ptr.vmem [resolvable:$true] %s20
      %26 = dma.hbm_to_vmem [thread:$0]  %s0, 256, %s21, [#allocation3], 128, 128, 8
    $region5: #{tpu_custom_call.1} parent=1 // pred_fallthru
      _
    // Predicated region
    $region6: #{tpu_custom_call.1} parent=1 // pred_check
      _
    $region7: #{tpu_custom_call.1} parent=1 // pred_check_branch
      %28 = sbr.rel (0) target = $region9
    $region8: #{tpu_custom_call.1} parent=1 // pred_region
      _
    $region9: #{tpu_custom_call.1} parent=1 // pred_fallthru
      _
    // Predicated region
    $region10: #{tpu_custom_call.1} parent=1 // pred_check
      _
    $region11: #{tpu_custom_call.1} parent=1 // pred_check_branch
      %30 = sbr.rel (0) target = $region13
    $region12: #{tpu_custom_call.1} parent=1 // pred_region
      _
    $region13: #{tpu_custom_call.1} parent=1 // pred_fallthru
      _
    // Predicated region
    $region14: #{tpu_custom_call.1} parent=1 // pred_check
      _
    $region15: #{tpu_custom_call.1} parent=1 // pred_check_branch
      %32 = sbr.rel (0) target = $region17
    $region16: #{tpu_custom_call.1} parent=1 // pred_region
      _
    $region17: #{tpu_custom_call.1} parent=1 // pred_fallthru
      _
    // Predicated region
    $region18: #{tpu_custom_call.1} parent=1 // pred_check
      _
    $region19: #{tpu_custom_call.1} parent=1 // pred_check_branch
      %34 = sbr.rel (0) target = $region21
    $region20: #{tpu_custom_call.1} parent=1 // pred_region
      _
    $region21: #{tpu_custom_call.1} parent=1 // pred_fallthru
      _
    // Predicated region
    $region22: #{tpu_custom_call.1} parent=1 // pred_check
      _
    $region23: #{tpu_custom_call.1} parent=1 // pred_check_branch
      %36 = sbr.rel (0) target = $region25
    $region24: #{tpu_custom_call.1} parent=1 // pred_region
      _
    $region25: #{tpu_custom_call.1} parent=1 // pred_fallthru
      _
    // Predicated region
    $region26: #{tpu_custom_call.1} parent=1 // pred_check
      _
    $region27: #{tpu_custom_call.1} parent=1 // pred_check_branch
      %38 = sbr.rel (0) target = $region29
    $region28: #{tpu_custom_call.1} parent=1 // pred_region
      _
    $region29: #{tpu_custom_call.1} parent=1 // pred_fallthru
      _
    // Predicated region
    $region30: #{tpu_custom_call.1} parent=1 // pred_check
      _
    $region31: #{tpu_custom_call.1} parent=1 // pred_check_branch
      %40 = sbr.rel (0) target = $region33
    $region32: #{tpu_custom_call.1} parent=1 // pred_region
      _
    $region33: #{tpu_custom_call.1} parent=1 // pred_fallthru
      _
    // Predicated region
    $region34: #{tpu_custom_call.1} parent=1 // pred_check
      _
    $region35: #{tpu_custom_call.1} parent=1 // pred_check_branch
      %42 = sbr.rel (0) target = $region37
    $region36: #{tpu_custom_call.1} parent=1 // pred_region
      %43 = dma.done [#allocation3], 256
    $region37: #{tpu_custom_call.1} parent=1 // pred_fallthru
      _
    %v45 = vld [vmem:[%s1] sm:$0xff]
    %s46 = scalar_lea.vmem %s1, 8
    %v47 = vld [vmem:[%s46] sm:$0xff]
    %s48 = scalar_lea.vmem %s1, 16
    %v49 = vld [vmem:[%s48] sm:$0xff]
    %s50 = scalar_lea.vmem %s1, 24
    %v51 = vld [vmem:[%s50] sm:$0xff]
    %s52 = scalar_lea.vmem %s1, 40
    %v53 = vld [vmem:[%s52] sm:$0xff]
    %s54 = scalar_lea.vmem %s1, 48
    %v55 = vld [vmem:[%s54] sm:$0xff]
    %s56 = scalar_lea.vmem %s1, 56
    %v57 = vld [vmem:[%s56] sm:$0xff]
    %s58 = scalar_lea.vmem %s1, 64
    %v59 = vld [vmem:[%s58] sm:$0xff]
    %v60 = vld [vmem:[%s2] sm:$0x3]
    %s61 = scalar_lea.vmem %s2, 2
    %v62 = vld [vmem:[%s61] sm:$0x3]
    %s63 = scalar_lea.vmem %s2, 4
    %v64 = vld [vmem:[%s63] sm:$0x3]
    %s65 = scalar_lea.vmem %s2, 6
    %v66 = vld [vmem:[%s65] sm:$0x3]
    %s67 = scalar_lea.vmem %s2, 8
    %v68 = vld [vmem:[%s67] sm:$0x3]
    %s69 = scalar_lea.vmem %s2, 10
    %v70 = vld [vmem:[%s69] sm:$0x3]
    %s71 = scalar_lea.vmem %s2, 12
    %v72 = vld [vmem:[%s71] sm:$0x3]
    %s73 = scalar_lea.vmem %s2, 14
    %v74 = vld [vmem:[%s73] sm:$0x3]
    %s75 = scalar_lea.vmem %s2, 16
    %v76 = vld [vmem:[%s75] sm:$0x3]
    %v77 = vld [vmem:[%s5] sm:$0x3]
    %s78 = scalar_lea.vmem %s5, 2
    %v79 = vld [vmem:[%s78] sm:$0x3]
    %s80 = scalar_lea.vmem %s5, 4
    %v81 = vld [vmem:[%s80] sm:$0x3]
    %s82 = scalar_lea.vmem %s5, 6
    %v83 = vld [vmem:[%s82] sm:$0x3]
    %s84 = scalar_lea.vmem %s5, 8
    %v85 = vld [vmem:[%s84] sm:$0x3]
    %s86 = scalar_lea.vmem %s5, 10
    %v87 = vld [vmem:[%s86] sm:$0x3]
    %s88 = scalar_lea.vmem %s5, 12
    %v89 = vld [vmem:[%s88] sm:$0x3]
    %s90 = scalar_lea.vmem %s5, 14
    %v91 = vld [vmem:[%s90] sm:$0x3]
    %s92 = scalar_lea.vmem %s5, 16
    %v93 = vld [vmem:[%s92] sm:$0x3]
    %v94 = vld [vmem:[%s3] sm:$0xf]
    %v95 = vld [vmem:[%s4] sm:$0xf]
    %v96 = vld [vmem:[%s6] sm:$0xf]
    %v97 = vld [vmem:[%s7] sm:$0xf]
    %v98 = vld [vmem:[#allocation2] sm:$0xff]
    %v100 = vcombine.high %v98, %v98
    %102 = vrot.lane.b32.xlu0 %v98, 17
    %v103 = vpop.permute.xlu0 %102
    %104 = vrot.lane.b32.xlu0 %v100, 17
    %v105 = vpop.permute.xlu0 %104
    %v106 = vlaneseq
    %v107 = vand.u32 %v106, 127
    %vm108 = vcmp.lt.s32.totalorder %v107, 17
    %v109 = vsel %vm108, %v103, %v105
    %v110 = vsel %vm108, %v105, %v103
    %v112 = vcombine.high %v45, %v45
    %v114 = vmul.f32 %v110, %v45
    %v115 = vmul.f32 %v109, %v112
    %v116 = vpack.c.bf16 %v114, %v114
    %v117 = vpack.c.bf16 %v115, %v115
    %118 = vrot.lane.b32.xlu0 %v98, 16
    %v119 = vpop.permute.xlu0 %118
    %120 = vrot.lane.b32.xlu0 %v100, 16
    %v121 = vpop.permute.xlu0 %120
    %vm122 = vcmp.lt.s32.totalorder %v107, 16
    %v123 = vsel %vm122, %v119, %v121
    %v124 = vsel %vm122, %v121, %v119
    %v126 = vcombine.high %v47, %v47
    %v128 = vmul.f32 %v124, %v47
    %v129 = vmul.f32 %v123, %v126
    %v130 = vpack.c.bf16 %v128, %v128
    %v131 = vpack.c.bf16 %v129, %v129
    %vm132 = vcmask 31744
    %v134 = vsel %vm132, %v62, 0
    %vm136 = vcmask 1041408
    %v138 = vsel %vm136, %v130, 0
    %v141 = vsel %vm136, %v131, 0
    %143 = vmatprep.subr.bf16.mxu0 %v141
    %144 = vmatpush1.bf16.msra.mxu0 %v138
    %145 = vmatprep.subr.bf16.mxu0 0
    %146 = vmatpush1.bf16.msra.mxu0 0
    %147 = vmatprep.subr.bf16.mxu0 0
    %148 = vmatpush1.bf16.msra.mxu0 0
    %149 = vmatprep.subr.bf16.mxu0 0
    %150 = vmatpush1.bf16.msra.mxu0 0
    %151 = vmatprep.subr.bf16.mxu0 0
    %152 = vmatpush1.bf16.msra.mxu0 0
    %153 = vmatprep.subr.bf16.mxu0 0
    %154 = vmatpush1.bf16.msra.mxu0 0
    %155 = vmatprep.subr.bf16.mxu0 0
    %156 = vmatpush1.bf16.msra.mxu0 0
    %157 = vmatprep.subr.bf16.mxu0 0
    %158 = vmatpush1.bf16.msra.mxu0 0
    %159 = vmatprep.subr.bf16.mxu0 0
    %160 = vmatpush1.bf16.msra.mxu0 0
    %161 = vmatprep.subr.bf16.mxu0 0
    %162 = vmatpush1.bf16.msra.mxu0 0
    %163 = vmatprep.subr.bf16.mxu0 0
    %164 = vmatpush1.bf16.msra.mxu0 0
    %165 = vmatprep.subr.bf16.mxu0 0
    %166 = vmatpush1.bf16.msra.mxu0 0
    %167 = vmatprep.subr.bf16.mxu0 0
    %168 = vmatpush1.bf16.msra.mxu0 0
    %169 = vmatprep.subr.bf16.mxu0 0
    %170 = vmatpush1.bf16.msra.mxu0 0
    %171 = vmatprep.subr.bf16.mxu0 0
    %172 = vmatpush1.bf16.msra.mxu0 0
    %173 = vmatprep.subr.bf16.mxu0 0
    %174 = vmatpush1.bf16.msra.mxu0 0
    %175 = vmatprep.mubr.bf16.mxu0 0
    %176 = vmatmul.mubr.bf16.gmra.mrb[0].mxu0 %v134
    %v177 = vpop.f32.mrb[0].mxu0
    %v178 = vadd.f32 0.0, %v177
    %v179 = vpop.f32.mrb[0].mxu0
    %v180 = vadd.f32 0.0, %v179
    %v181 = vpop.f32.mrb[0].mxu0
    %v182 = vpop.f32.mrb[0].mxu0
    %183 = vdwg.mxu0
    %v185 = vsel %vm132, %v60, 0
    %v188 = vsel %vm136, %v116, 0
    %v191 = vsel %vm136, %v117, 0
    %193 = vmatprep.subr.bf16.mxu0 %v191
    %194 = vmatpush1.bf16.msra.mxu0 %v188
    %195 = vmatprep.subr.bf16.mxu0 0
    %196 = vmatpush1.bf16.msra.mxu0 0
    %197 = vmatprep.subr.bf16.mxu0 0
    %198 = vmatpush1.bf16.msra.mxu0 0
    %199 = vmatprep.subr.bf16.mxu0 0
    %200 = vmatpush1.bf16.msra.mxu0 0
    %201 = vmatprep.subr.bf16.mxu0 0
    %202 = vmatpush1.bf16.msra.mxu0 0
    %203 = vmatprep.subr.bf16.mxu0 0
    %204 = vmatpush1.bf16.msra.mxu0 0
    %205 = vmatprep.subr.bf16.mxu0 0
    %206 = vmatpush1.bf16.msra.mxu0 0
    %207 = vmatprep.subr.bf16.mxu0 0
    %208 = vmatpush1.bf16.msra.mxu0 0
    %209 = vmatprep.subr.bf16.mxu0 0
    %210 = vmatpush1.bf16.msra.mxu0 0
    %211 = vmatprep.subr.bf16.mxu0 0
    %212 = vmatpush1.bf16.msra.mxu0 0
    %213 = vmatprep.subr.bf16.mxu0 0
    %214 = vmatpush1.bf16.msra.mxu0 0
    %215 = vmatprep.subr.bf16.mxu0 0
    %216 = vmatpush1.bf16.msra.mxu0 0
    %217 = vmatprep.subr.bf16.mxu0 0
    %218 = vmatpush1.bf16.msra.mxu0 0
    %219 = vmatprep.subr.bf16.mxu0 0
    %220 = vmatpush1.bf16.msra.mxu0 0
    %221 = vmatprep.subr.bf16.mxu0 0
    %222 = vmatpush1.bf16.msra.mxu0 0
    %223 = vmatprep.subr.bf16.mxu0 0
    %224 = vmatpush1.bf16.msra.mxu0 0
    %225 = vmatprep.mubr.bf16.mxu0 0
    %226 = vmatmul.mubr.bf16.gmra.mrb[0].mxu0 %v185
    %v227 = vpop.f32.mrb[0].mxu0
    %v228 = vadd.f32 %v178, %v227
    %v229 = vpop.f32.mrb[0].mxu0
    %v230 = vadd.f32 %v180, %v229
    %v231 = vpop.f32.mrb[0].mxu0
    %v232 = vpop.f32.mrb[0].mxu0
    %233 = vdwg.mxu0
    %234 = vrot.lane.b32.xlu0 %v98, 15
    %v235 = vpop.permute.xlu0 %234
    %236 = vrot.lane.b32.xlu0 %v100, 15
    %v237 = vpop.permute.xlu0 %236
    %vm238 = vcmp.lt.s32.totalorder %v107, 15
    %v239 = vsel %vm238, %v235, %v237
    %v240 = vsel %vm238, %v237, %v235
    %v242 = vcombine.high %v49, %v49
    %v244 = vmul.f32 %v240, %v49
    %v245 = vmul.f32 %v239, %v242
    %v246 = vpack.c.bf16 %v244, %v244
    %v247 = vpack.c.bf16 %v245, %v245
    %v249 = vsel %vm132, %v64, 0
    %v252 = vsel %vm136, %v246, 0
    %v255 = vsel %vm136, %v247, 0
    %257 = vmatprep.subr.bf16.mxu0 %v255
    %258 = vmatpush1.bf16.msra.mxu0 %v252
    %259 = vmatprep.subr.bf16.mxu0 0
    %260 = vmatpush1.bf16.msra.mxu0 0
    %261 = vmatprep.subr.bf16.mxu0 0
    %262 = vmatpush1.bf16.msra.mxu0 0
    %263 = vmatprep.subr.bf16.mxu0 0
    %264 = vmatpush1.bf16.msra.mxu0 0
    %265 = vmatprep.subr.bf16.mxu0 0
    %266 = vmatpush1.bf16.msra.mxu0 0
    %267 = vmatprep.subr.bf16.mxu0 0
    %268 = vmatpush1.bf16.msra.mxu0 0
    %269 = vmatprep.subr.bf16.mxu0 0
    %270 = vmatpush1.bf16.msra.mxu0 0
    %271 = vmatprep.subr.bf16.mxu0 0
    %272 = vmatpush1.bf16.msra.mxu0 0
    %273 = vmatprep.subr.bf16.mxu0 0
    %274 = vmatpush1.bf16.msra.mxu0 0
    %275 = vmatprep.subr.bf16.mxu0 0
    %276 = vmatpush1.bf16.msra.mxu0 0
    %277 = vmatprep.subr.bf16.mxu0 0
    %278 = vmatpush1.bf16.msra.mxu0 0
    %279 = vmatprep.subr.bf16.mxu0 0
    %280 = vmatpush1.bf16.msra.mxu0 0
    %281 = vmatprep.subr.bf16.mxu0 0
    %282 = vmatpush1.bf16.msra.mxu0 0
    %283 = vmatprep.subr.bf16.mxu0 0
    %284 = vmatpush1.bf16.msra.mxu0 0
    %285 = vmatprep.subr.bf16.mxu0 0
    %286 = vmatpush1.bf16.msra.mxu0 0
    %287 = vmatprep.subr.bf16.mxu0 0
    %288 = vmatpush1.bf16.msra.mxu0 0
    %289 = vmatprep.mubr.bf16.mxu0 0
    %290 = vmatmul.mubr.bf16.gmra.mrb[0].mxu0 %v249
    %v291 = vpop.f32.mrb[0].mxu0
    %v292 = vadd.f32 0.0, %v291
    %v293 = vpop.f32.mrb[0].mxu0
    %v294 = vadd.f32 0.0, %v293
    %v295 = vpop.f32.mrb[0].mxu0
    %v296 = vpop.f32.mrb[0].mxu0
    %297 = vdwg.mxu0
    %v298 = vadd.f32 %v228, %v292
    %v299 = vadd.f32 %v230, %v294
    %300 = vrot.lane.b32.xlu0 %v98, 1
    %v301 = vpop.permute.xlu0 %300
    %302 = vrot.lane.b32.xlu0 %v100, 1
    %v303 = vpop.permute.xlu0 %302
    %vm304 = vcmp.lt.s32.totalorder %v107, 1
    %v305 = vsel %vm304, %v301, %v303
    %v306 = vsel %vm304, %v303, %v301
    %v308 = vcombine.high %v51, %v51
    %v310 = vmul.f32 %v306, %v51
    %v311 = vmul.f32 %v305, %v308
    %v312 = vpack.c.bf16 %v310, %v310
    %v313 = vpack.c.bf16 %v311, %v311
    %v315 = vsel %vm132, %v66, 0
    %v318 = vsel %vm136, %v312, 0
    %v321 = vsel %vm136, %v313, 0
    %323 = vmatprep.subr.bf16.mxu0 %v321
    %324 = vmatpush1.bf16.msra.mxu0 %v318
    %325 = vmatprep.subr.bf16.mxu0 0
    %326 = vmatpush1.bf16.msra.mxu0 0
    %327 = vmatprep.subr.bf16.mxu0 0
    %328 = vmatpush1.bf16.msra.mxu0 0
    %329 = vmatprep.subr.bf16.mxu0 0
    %330 = vmatpush1.bf16.msra.mxu0 0
    %331 = vmatprep.subr.bf16.mxu0 0
    %332 = vmatpush1.bf16.msra.mxu0 0
    %333 = vmatprep.subr.bf16.mxu0 0
    %334 = vmatpush1.bf16.msra.mxu0 0
    %335 = vmatprep.subr.bf16.mxu0 0
    %336 = vmatpush1.bf16.msra.mxu0 0
    %337 = vmatprep.subr.bf16.mxu0 0
    %338 = vmatpush1.bf16.msra.mxu0 0
    %339 = vmatprep.subr.bf16.mxu0 0
    %340 = vmatpush1.bf16.msra.mxu0 0
    %341 = vmatprep.subr.bf16.mxu0 0
    %342 = vmatpush1.bf16.msra.mxu0 0
    %343 = vmatprep.subr.bf16.mxu0 0
    %344 = vmatpush1.bf16.msra.mxu0 0
    %345 = vmatprep.subr.bf16.mxu0 0
    %346 = vmatpush1.bf16.msra.mxu0 0
    %347 = vmatprep.subr.bf16.mxu0 0
    %348 = vmatpush1.bf16.msra.mxu0 0
    %349 = vmatprep.subr.bf16.mxu0 0
    %350 = vmatpush1.bf16.msra.mxu0 0
    %351 = vmatprep.subr.bf16.mxu0 0
    %352 = vmatpush1.bf16.msra.mxu0 0
    %353 = vmatprep.subr.bf16.mxu0 0
    %354 = vmatpush1.bf16.msra.mxu0 0
    %355 = vmatprep.mubr.bf16.mxu0 0
    %356 = vmatmul.mubr.bf16.gmra.mrb[0].mxu0 %v315
    %v357 = vpop.f32.mrb[0].mxu0
    %v358 = vadd.f32 0.0, %v357
    %v359 = vpop.f32.mrb[0].mxu0
    %v360 = vadd.f32 0.0, %v359
    %v361 = vpop.f32.mrb[0].mxu0
    %v362 = vpop.f32.mrb[0].mxu0
    %363 = vdwg.mxu0
    %v364 = vadd.f32 %v298, %v358
    %v365 = vadd.f32 %v299, %v360
    %v366 = vpack.c.bf16 %v98, %v98
    %v367 = vpack.c.bf16 %v100, %v100
    %v369 = vsel %vm132, %v68, 0
    %v372 = vsel %vm136, %v366, 0
    %v375 = vsel %vm136, %v367, 0
    %377 = vmatprep.subr.bf16.mxu0 %v375
    %378 = vmatpush1.bf16.msra.mxu0 %v372
    %379 = vmatprep.subr.bf16.mxu0 0
    %380 = vmatpush1.bf16.msra.mxu0 0
    %381 = vmatprep.subr.bf16.mxu0 0
    %382 = vmatpush1.bf16.msra.mxu0 0
    %383 = vmatprep.subr.bf16.mxu0 0
    %384 = vmatpush1.bf16.msra.mxu0 0
    %385 = vmatprep.subr.bf16.mxu0 0
    %386 = vmatpush1.bf16.msra.mxu0 0
    %387 = vmatprep.subr.bf16.mxu0 0
    %388 = vmatpush1.bf16.msra.mxu0 0
    %389 = vmatprep.subr.bf16.mxu0 0
    %390 = vmatpush1.bf16.msra.mxu0 0
    %391 = vmatprep.subr.bf16.mxu0 0
    %392 = vmatpush1.bf16.msra.mxu0 0
    %393 = vmatprep.subr.bf16.mxu0 0
    %394 = vmatpush1.bf16.msra.mxu0 0
    %395 = vmatprep.subr.bf16.mxu0 0
    %396 = vmatpush1.bf16.msra.mxu0 0
    %397 = vmatprep.subr.bf16.mxu0 0
    %398 = vmatpush1.bf16.msra.mxu0 0
    %399 = vmatprep.subr.bf16.mxu0 0
    %400 = vmatpush1.bf16.msra.mxu0 0
    %401 = vmatprep.subr.bf16.mxu0 0
    %402 = vmatpush1.bf16.msra.mxu0 0
    %403 = vmatprep.subr.bf16.mxu0 0
    %404 = vmatpush1.bf16.msra.mxu0 0
    %405 = vmatprep.subr.bf16.mxu0 0
    %406 = vmatpush1.bf16.msra.mxu0 0
    %407 = vmatprep.subr.bf16.mxu0 0
    %408 = vmatpush1.bf16.msra.mxu0 0
    %409 = vmatprep.mubr.bf16.mxu0 0
    %410 = vmatmul.mubr.bf16.gmra.mrb[0].mxu0 %v369
    %v411 = vpop.f32.mrb[0].mxu0
    %v412 = vadd.f32 0.0, %v411
    %v413 = vpop.f32.mrb[0].mxu0
    %v414 = vadd.f32 0.0, %v413
    %v415 = vpop.f32.mrb[0].mxu0
    %v416 = vpop.f32.mrb[0].mxu0
    %417 = vdwg.mxu0
    %v418 = vadd.f32 %v364, %v412
    %v419 = vadd.f32 %v365, %v414
    %420 = vrot.lane.b32.xlu0 %v98, 127
    %v421 = vpop.permute.xlu0 %420
    %422 = vrot.lane.b32.xlu0 %v100, 127
    %v423 = vpop.permute.xlu0 %422
    %vm424 = vcmp.lt.s32.totalorder %v107, 127
    %v425 = vsel %vm424, %v421, %v423
    %v426 = vsel %vm424, %v423, %v421
    %v428 = vcombine.high %v53, %v53
    %v430 = vmul.f32 %v425, %v53
    %v431 = vmul.f32 %v426, %v428
    %v432 = vpack.c.bf16 %v430, %v430
    %v433 = vpack.c.bf16 %v431, %v431
    %v435 = vsel %vm132, %v70, 0
    %v438 = vsel %vm136, %v432, 0
    %v441 = vsel %vm136, %v433, 0
    %443 = vmatprep.subr.bf16.mxu0 %v441
    %444 = vmatpush1.bf16.msra.mxu0 %v438
    %445 = vmatprep.subr.bf16.mxu0 0
    %446 = vmatpush1.bf16.msra.mxu0 0
    %447 = vmatprep.subr.bf16.mxu0 0
    %448 = vmatpush1.bf16.msra.mxu0 0
    %449 = vmatprep.subr.bf16.mxu0 0
    %450 = vmatpush1.bf16.msra.mxu0 0
    %451 = vmatprep.subr.bf16.mxu0 0
    %452 = vmatpush1.bf16.msra.mxu0 0
    %453 = vmatprep.subr.bf16.mxu0 0
    %454 = vmatpush1.bf16.msra.mxu0 0
    %455 = vmatprep.subr.bf16.mxu0 0
    %456 = vmatpush1.bf16.msra.mxu0 0
    %457 = vmatprep.subr.bf16.mxu0 0
    %458 = vmatpush1.bf16.msra.mxu0 0
    %459 = vmatprep.subr.bf16.mxu0 0
    %460 = vmatpush1.bf16.msra.mxu0 0
    %461 = vmatprep.subr.bf16.mxu0 0
    %462 = vmatpush1.bf16.msra.mxu0 0
    %463 = vmatprep.subr.bf16.mxu0 0
    %464 = vmatpush1.bf16.msra.mxu0 0
    %465 = vmatprep.subr.bf16.mxu0 0
    %466 = vmatpush1.bf16.msra.mxu0 0
    %467 = vmatprep.subr.bf16.mxu0 0
    %468 = vmatpush1.bf16.msra.mxu0 0
    %469 = vmatprep.subr.bf16.mxu0 0
    %470 = vmatpush1.bf16.msra.mxu0 0
    %471 = vmatprep.subr.bf16.mxu0 0
    %472 = vmatpush1.bf16.msra.mxu0 0
    %473 = vmatprep.subr.bf16.mxu0 0
    %474 = vmatpush1.bf16.msra.mxu0 0
    %475 = vmatprep.mubr.bf16.mxu0 0
    %476 = vmatmul.mubr.bf16.gmra.mrb[0].mxu0 %v435
    %v477 = vpop.f32.mrb[0].mxu0
    %v478 = vadd.f32 0.0, %v477
    %v479 = vpop.f32.mrb[0].mxu0
    %v480 = vadd.f32 0.0, %v479
    %v481 = vpop.f32.mrb[0].mxu0
    %v482 = vpop.f32.mrb[0].mxu0
    %483 = vdwg.mxu0
    %v484 = vadd.f32 %v418, %v478
    %v485 = vadd.f32 %v419, %v480
    %486 = vrot.lane.b32.xlu0 %v98, 113
    %v487 = vpop.permute.xlu0 %486
    %488 = vrot.lane.b32.xlu0 %v100, 113
    %v489 = vpop.permute.xlu0 %488
    %vm490 = vcmp.lt.s32.totalorder %v107, 113
    %v491 = vsel %vm490, %v487, %v489
    %v492 = vsel %vm490, %v489, %v487
    %v494 = vcombine.high %v55, %v55
    %v496 = vmul.f32 %v491, %v55
    %v497 = vmul.f32 %v492, %v494
    %v498 = vpack.c.bf16 %v496, %v496
    %v499 = vpack.c.bf16 %v497, %v497
    %v501 = vsel %vm132, %v72, 0
    %v504 = vsel %vm136, %v498, 0
    %v507 = vsel %vm136, %v499, 0
    %509 = vmatprep.subr.bf16.mxu0 %v507
    %510 = vmatpush1.bf16.msra.mxu0 %v504
    %511 = vmatprep.subr.bf16.mxu0 0
    %512 = vmatpush1.bf16.msra.mxu0 0
    %513 = vmatprep.subr.bf16.mxu0 0
    %514 = vmatpush1.bf16.msra.mxu0 0
    %515 = vmatprep.subr.bf16.mxu0 0
    %516 = vmatpush1.bf16.msra.mxu0 0
    %517 = vmatprep.subr.bf16.mxu0 0
    %518 = vmatpush1.bf16.msra.mxu0 0
    %519 = vmatprep.subr.bf16.mxu0 0
    %520 = vmatpush1.bf16.msra.mxu0 0
    %521 = vmatprep.subr.bf16.mxu0 0
    %522 = vmatpush1.bf16.msra.mxu0 0
    %523 = vmatprep.subr.bf16.mxu0 0
    %524 = vmatpush1.bf16.msra.mxu0 0
    %525 = vmatprep.subr.bf16.mxu0 0
    %526 = vmatpush1.bf16.msra.mxu0 0
    %527 = vmatprep.subr.bf16.mxu0 0
    %528 = vmatpush1.bf16.msra.mxu0 0
    %529 = vmatprep.subr.bf16.mxu0 0
    %530 = vmatpush1.bf16.msra.mxu0 0
    %531 = vmatprep.subr.bf16.mxu0 0
    %532 = vmatpush1.bf16.msra.mxu0 0
    %533 = vmatprep.subr.bf16.mxu0 0
    %534 = vmatpush1.bf16.msra.mxu0 0
    %535 = vmatprep.subr.bf16.mxu0 0
    %536 = vmatpush1.bf16.msra.mxu0 0
    %537 = vmatprep.subr.bf16.mxu0 0
    %538 = vmatpush1.bf16.msra.mxu0 0
    %539 = vmatprep.subr.bf16.mxu0 0
    %540 = vmatpush1.bf16.msra.mxu0 0
    %541 = vmatprep.mubr.bf16.mxu0 0
    %542 = vmatmul.mubr.bf16.gmra.mrb[0].mxu0 %v501
    %v543 = vpop.f32.mrb[0].mxu0
    %v544 = vadd.f32 0.0, %v543
    %v545 = vpop.f32.mrb[0].mxu0
    %v546 = vadd.f32 0.0, %v545
    %v547 = vpop.f32.mrb[0].mxu0
    %v548 = vpop.f32.mrb[0].mxu0
    %549 = vdwg.mxu0
    %v550 = vadd.f32 %v484, %v544
    %v551 = vadd.f32 %v485, %v546
    %552 = vrot.lane.b32.xlu0 %v98, 112
    %v553 = vpop.permute.xlu0 %552
    %554 = vrot.lane.b32.xlu0 %v100, 112
    %v555 = vpop.permute.xlu0 %554
    %vm556 = vcmp.lt.s32.totalorder %v107, 112
    %v557 = vsel %vm556, %v553, %v555
    %v558 = vsel %vm556, %v555, %v553
    %v560 = vcombine.high %v57, %v57
    %v562 = vmul.f32 %v557, %v57
    %v563 = vmul.f32 %v558, %v560
    %v564 = vpack.c.bf16 %v562, %v562
    %v565 = vpack.c.bf16 %v563, %v563
    %v567 = vsel %vm132, %v74, 0
    %v570 = vsel %vm136, %v564, 0
    %v573 = vsel %vm136, %v565, 0
    %575 = vmatprep.subr.bf16.mxu0 %v573
    %576 = vmatpush1.bf16.msra.mxu0 %v570
    %577 = vmatprep.subr.bf16.mxu0 0
    %578 = vmatpush1.bf16.msra.mxu0 0
    %579 = vmatprep.subr.bf16.mxu0 0
    %580 = vmatpush1.bf16.msra.mxu0 0
    %581 = vmatprep.subr.bf16.mxu0 0
    %582 = vmatpush1.bf16.msra.mxu0 0
    %583 = vmatprep.subr.bf16.mxu0 0
    %584 = vmatpush1.bf16.msra.mxu0 0
    %585 = vmatprep.subr.bf16.mxu0 0
    %586 = vmatpush1.bf16.msra.mxu0 0
    %587 = vmatprep.subr.bf16.mxu0 0
    %588 = vmatpush1.bf16.msra.mxu0 0
    %589 = vmatprep.subr.bf16.mxu0 0
    %590 = vmatpush1.bf16.msra.mxu0 0
    %591 = vmatprep.subr.bf16.mxu0 0
    %592 = vmatpush1.bf16.msra.mxu0 0
    %593 = vmatprep.subr.bf16.mxu0 0
    %594 = vmatpush1.bf16.msra.mxu0 0
    %595 = vmatprep.subr.bf16.mxu0 0
    %596 = vmatpush1.bf16.msra.mxu0 0
    %597 = vmatprep.subr.bf16.mxu0 0
    %598 = vmatpush1.bf16.msra.mxu0 0
    %599 = vmatprep.subr.bf16.mxu0 0
    %600 = vmatpush1.bf16.msra.mxu0 0
    %601 = vmatprep.subr.bf16.mxu0 0
    %602 = vmatpush1.bf16.msra.mxu0 0
    %603 = vmatprep.subr.bf16.mxu0 0
    %604 = vmatpush1.bf16.msra.mxu0 0
    %605 = vmatprep.subr.bf16.mxu0 0
    %606 = vmatpush1.bf16.msra.mxu0 0
    %607 = vmatprep.mubr.bf16.mxu0 0
    %608 = vmatmul.mubr.bf16.gmra.mrb[0].mxu0 %v567
    %v609 = vpop.f32.mrb[0].mxu0
    %v610 = vadd.f32 0.0, %v609
    %v611 = vpop.f32.mrb[0].mxu0
    %v612 = vadd.f32 0.0, %v611
    %v613 = vpop.f32.mrb[0].mxu0
    %v614 = vpop.f32.mrb[0].mxu0
    %615 = vdwg.mxu0
    %v616 = vadd.f32 %v550, %v610
    %v617 = vadd.f32 %v551, %v612
    %618 = vrot.lane.b32.xlu0 %v98, 111
    %v619 = vpop.permute.xlu0 %618
    %620 = vrot.lane.b32.xlu0 %v100, 111
    %v621 = vpop.permute.xlu0 %620
    %vm622 = vcmp.lt.s32.totalorder %v107, 111
    %v623 = vsel %vm622, %v619, %v621
    %v624 = vsel %vm622, %v621, %v619
    %v626 = vcombine.high %v59, %v59
    %v628 = vmul.f32 %v623, %v59
    %v629 = vmul.f32 %v624, %v626
    %v630 = vpack.c.bf16 %v628, %v628
    %v631 = vpack.c.bf16 %v629, %v629
    %v633 = vsel %vm132, %v76, 0
    %v636 = vsel %vm136, %v630, 0
    %v639 = vsel %vm136, %v631, 0
    %641 = vmatprep.subr.bf16.mxu0 %v639
    %642 = vmatpush1.bf16.msra.mxu0 %v636
    %643 = vmatprep.subr.bf16.mxu0 0
    %644 = vmatpush1.bf16.msra.mxu0 0
    %645 = vmatprep.subr.bf16.mxu0 0
    %646 = vmatpush1.bf16.msra.mxu0 0
    %647 = vmatprep.subr.bf16.mxu0 0
    %648 = vmatpush1.bf16.msra.mxu0 0
    %649 = vmatprep.subr.bf16.mxu0 0
    %650 = vmatpush1.bf16.msra.mxu0 0
    %651 = vmatprep.subr.bf16.mxu0 0
    %652 = vmatpush1.bf16.msra.mxu0 0
    %653 = vmatprep.subr.bf16.mxu0 0
    %654 = vmatpush1.bf16.msra.mxu0 0
    %655 = vmatprep.subr.bf16.mxu0 0
    %656 = vmatpush1.bf16.msra.mxu0 0
    %657 = vmatprep.subr.bf16.mxu0 0
    %658 = vmatpush1.bf16.msra.mxu0 0
    %659 = vmatprep.subr.bf16.mxu0 0
    %660 = vmatpush1.bf16.msra.mxu0 0
    %661 = vmatprep.subr.bf16.mxu0 0
    %662 = vmatpush1.bf16.msra.mxu0 0
    %663 = vmatprep.subr.bf16.mxu0 0
    %664 = vmatpush1.bf16.msra.mxu0 0
    %665 = vmatprep.subr.bf16.mxu0 0
    %666 = vmatpush1.bf16.msra.mxu0 0
    %667 = vmatprep.subr.bf16.mxu0 0
    %668 = vmatpush1.bf16.msra.mxu0 0
    %669 = vmatprep.subr.bf16.mxu0 0
    %670 = vmatpush1.bf16.msra.mxu0 0
    %671 = vmatprep.subr.bf16.mxu0 0
    %672 = vmatpush1.bf16.msra.mxu0 0
    %673 = vmatprep.mubr.bf16.mxu0 0
    %674 = vmatmul.mubr.bf16.gmra.mrb[0].mxu0 %v633
    %v675 = vpop.f32.mrb[0].mxu0
    %v676 = vadd.f32 0.0, %v675
    %v677 = vpop.f32.mrb[0].mxu0
    %v678 = vadd.f32 0.0, %v677
    %v679 = vpop.f32.mrb[0].mxu0
    %v680 = vpop.f32.mrb[0].mxu0
    %681 = vdwg.mxu0
    %v682 = vadd.f32 %v616, %v676
    %v683 = vadd.f32 %v617, %v678
    %685 = vset.pattern.permute.xlu0 0
    %686 = vperm.xlu0 %685, %v94
    %v687 = vpop.permute.xlu0 %686
    %v689 = vmul.f32 %v682, %v687
    %v690 = vmul.f32 %v683, %v687
    %692 = vset.pattern.permute.xlu0 0
    %693 = vperm.xlu0 %692, %v95
    %v694 = vpop.permute.xlu0 %693
    %v696 = vadd.f32 %v689, %v694
    %v697 = vadd.f32 %v690, %v694
    %v698 = vmax.f32 %v696, 0.0
    %v699 = vmax.f32 %v697, 0.0
    %700 = vrot.lane.b32.xlu0 %v698, 17
    %v701 = vpop.permute.xlu0 %700
    %702 = vrot.lane.b32.xlu0 %v699, 17
    %v703 = vpop.permute.xlu0 %702
    %v704 = vsel %vm108, %v701, %v703
    %v705 = vsel %vm108, %v703, %v701
    %v706 = vmul.f32 %v705, %v45
    %v707 = vmul.f32 %v704, %v112
    %v708 = vpack.c.bf16 %v706, %v706
    %v709 = vpack.c.bf16 %v707, %v707
    %710 = vrot.lane.b32.xlu0 %v698, 16
    %v711 = vpop.permute.xlu0 %710
    %712 = vrot.lane.b32.xlu0 %v699, 16
    %v713 = vpop.permute.xlu0 %712
    %v714 = vsel %vm122, %v711, %v713
    %v715 = vsel %vm122, %v713, %v711
    %v716 = vmul.f32 %v715, %v47
    %v717 = vmul.f32 %v714, %v126
    %v718 = vpack.c.bf16 %v716, %v716
    %v719 = vpack.c.bf16 %v717, %v717
    %v721 = vsel %vm132, %v79, 0
    %v724 = vsel %vm136, %v718, 0
    %v727 = vsel %vm136, %v719, 0
    %729 = vmatprep.subr.bf16.mxu0 %v727
    %730 = vmatpush1.bf16.msra.mxu0 %v724
    %731 = vmatprep.subr.bf16.mxu0 0
    %732 = vmatpush1.bf16.msra.mxu0 0
    %733 = vmatprep.subr.bf16.mxu0 0
    %734 = vmatpush1.bf16.msra.mxu0 0
    %735 = vmatprep.subr.bf16.mxu0 0
    %736 = vmatpush1.bf16.msra.mxu0 0
    %737 = vmatprep.subr.bf16.mxu0 0
    %738 = vmatpush1.bf16.msra.mxu0 0
    %739 = vmatprep.subr.bf16.mxu0 0
    %740 = vmatpush1.bf16.msra.mxu0 0
    %741 = vmatprep.subr.bf16.mxu0 0
    %742 = vmatpush1.bf16.msra.mxu0 0
    %743 = vmatprep.subr.bf16.mxu0 0
    %744 = vmatpush1.bf16.msra.mxu0 0
    %745 = vmatprep.subr.bf16.mxu0 0
    %746 = vmatpush1.bf16.msra.mxu0 0
    %747 = vmatprep.subr.bf16.mxu0 0
    %748 = vmatpush1.bf16.msra.mxu0 0
    %749 = vmatprep.subr.bf16.mxu0 0
    %750 = vmatpush1.bf16.msra.mxu0 0
    %751 = vmatprep.subr.bf16.mxu0 0
    %752 = vmatpush1.bf16.msra.mxu0 0
    %753 = vmatprep.subr.bf16.mxu0 0
    %754 = vmatpush1.bf16.msra.mxu0 0
    %755 = vmatprep.subr.bf16.mxu0 0
    %756 = vmatpush1.bf16.msra.mxu0 0
    %757 = vmatprep.subr.bf16.mxu0 0
    %758 = vmatpush1.bf16.msra.mxu0 0
    %759 = vmatprep.subr.bf16.mxu0 0
    %760 = vmatpush1.bf16.msra.mxu0 0
    %761 = vmatprep.mubr.bf16.mxu0 0
    %762 = vmatmul.mubr.bf16.gmra.mrb[0].mxu0 %v721
    %v763 = vpop.f32.mrb[0].mxu0
    %v764 = vadd.f32 0.0, %v763
    %v765 = vpop.f32.mrb[0].mxu0
    %v766 = vadd.f32 0.0, %v765
    %v767 = vpop.f32.mrb[0].mxu0
    %v768 = vpop.f32.mrb[0].mxu0
    %769 = vdwg.mxu0
    %v771 = vsel %vm132, %v77, 0
    %v774 = vsel %vm136, %v708, 0
    %v777 = vsel %vm136, %v709, 0
    %779 = vmatprep.subr.bf16.mxu0 %v777
    %780 = vmatpush1.bf16.msra.mxu0 %v774
    %781 = vmatprep.subr.bf16.mxu0 0
    %782 = vmatpush1.bf16.msra.mxu0 0
    %783 = vmatprep.subr.bf16.mxu0 0
    %784 = vmatpush1.bf16.msra.mxu0 0
    %785 = vmatprep.subr.bf16.mxu0 0
    %786 = vmatpush1.bf16.msra.mxu0 0
    %787 = vmatprep.subr.bf16.mxu0 0
    %788 = vmatpush1.bf16.msra.mxu0 0
    %789 = vmatprep.subr.bf16.mxu0 0
    %790 = vmatpush1.bf16.msra.mxu0 0
    %791 = vmatprep.subr.bf16.mxu0 0
    %792 = vmatpush1.bf16.msra.mxu0 0
    %793 = vmatprep.subr.bf16.mxu0 0
    %794 = vmatpush1.bf16.msra.mxu0 0
    %795 = vmatprep.subr.bf16.mxu0 0
    %796 = vmatpush1.bf16.msra.mxu0 0
    %797 = vmatprep.subr.bf16.mxu0 0
    %798 = vmatpush1.bf16.msra.mxu0 0
    %799 = vmatprep.subr.bf16.mxu0 0
    %800 = vmatpush1.bf16.msra.mxu0 0
    %801 = vmatprep.subr.bf16.mxu0 0
    %802 = vmatpush1.bf16.msra.mxu0 0
    %803 = vmatprep.subr.bf16.mxu0 0
    %804 = vmatpush1.bf16.msra.mxu0 0
    %805 = vmatprep.subr.bf16.mxu0 0
    %806 = vmatpush1.bf16.msra.mxu0 0
    %807 = vmatprep.subr.bf16.mxu0 0
    %808 = vmatpush1.bf16.msra.mxu0 0
    %809 = vmatprep.subr.bf16.mxu0 0
    %810 = vmatpush1.bf16.msra.mxu0 0
    %811 = vmatprep.mubr.bf16.mxu0 0
    %812 = vmatmul.mubr.bf16.gmra.mrb[0].mxu0 %v771
    %v813 = vpop.f32.mrb[0].mxu0
    %v814 = vadd.f32 %v764, %v813
    %v815 = vpop.f32.mrb[0].mxu0
    %v816 = vadd.f32 %v766, %v815
    %v817 = vpop.f32.mrb[0].mxu0
    %v818 = vpop.f32.mrb[0].mxu0
    %819 = vdwg.mxu0
    %820 = vrot.lane.b32.xlu0 %v698, 15
    %v821 = vpop.permute.xlu0 %820
    %822 = vrot.lane.b32.xlu0 %v699, 15
    %v823 = vpop.permute.xlu0 %822
    %v824 = vsel %vm238, %v821, %v823
    %v825 = vsel %vm238, %v823, %v821
    %v826 = vmul.f32 %v825, %v49
    %v827 = vmul.f32 %v824, %v242
    %v828 = vpack.c.bf16 %v826, %v826
    %v829 = vpack.c.bf16 %v827, %v827
    %v831 = vsel %vm132, %v81, 0
    %v834 = vsel %vm136, %v828, 0
    %v837 = vsel %vm136, %v829, 0
    %839 = vmatprep.subr.bf16.mxu0 %v837
    %840 = vmatpush1.bf16.msra.mxu0 %v834
    %841 = vmatprep.subr.bf16.mxu0 0
    %842 = vmatpush1.bf16.msra.mxu0 0
    %843 = vmatprep.subr.bf16.mxu0 0
    %844 = vmatpush1.bf16.msra.mxu0 0
    %845 = vmatprep.subr.bf16.mxu0 0
    %846 = vmatpush1.bf16.msra.mxu0 0
    %847 = vmatprep.subr.bf16.mxu0 0
    %848 = vmatpush1.bf16.msra.mxu0 0
    %849 = vmatprep.subr.bf16.mxu0 0
    %850 = vmatpush1.bf16.msra.mxu0 0
    %851 = vmatprep.subr.bf16.mxu0 0
    %852 = vmatpush1.bf16.msra.mxu0 0
    %853 = vmatprep.subr.bf16.mxu0 0
    %854 = vmatpush1.bf16.msra.mxu0 0
    %855 = vmatprep.subr.bf16.mxu0 0
    %856 = vmatpush1.bf16.msra.mxu0 0
    %857 = vmatprep.subr.bf16.mxu0 0
    %858 = vmatpush1.bf16.msra.mxu0 0
    %859 = vmatprep.subr.bf16.mxu0 0
    %860 = vmatpush1.bf16.msra.mxu0 0
    %861 = vmatprep.subr.bf16.mxu0 0
    %862 = vmatpush1.bf16.msra.mxu0 0
    %863 = vmatprep.subr.bf16.mxu0 0
    %864 = vmatpush1.bf16.msra.mxu0 0
    %865 = vmatprep.subr.bf16.mxu0 0
    %866 = vmatpush1.bf16.msra.mxu0 0
    %867 = vmatprep.subr.bf16.mxu0 0
    %868 = vmatpush1.bf16.msra.mxu0 0
    %869 = vmatprep.subr.bf16.mxu0 0
    %870 = vmatpush1.bf16.msra.mxu0 0
    %871 = vmatprep.mubr.bf16.mxu0 0
    %872 = vmatmul.mubr.bf16.gmra.mrb[0].mxu0 %v831
    %v873 = vpop.f32.mrb[0].mxu0
    %v874 = vadd.f32 0.0, %v873
    %v875 = vpop.f32.mrb[0].mxu0
    %v876 = vadd.f32 0.0, %v875
    %v877 = vpop.f32.mrb[0].mxu0
    %v878 = vpop.f32.mrb[0].mxu0
    %879 = vdwg.mxu0
    %v880 = vadd.f32 %v814, %v874
    %v881 = vadd.f32 %v816, %v876
    %882 = vrot.lane.b32.xlu0 %v698, 1
    %v883 = vpop.permute.xlu0 %882
    %884 = vrot.lane.b32.xlu0 %v699, 1
    %v885 = vpop.permute.xlu0 %884
    %v886 = vsel %vm304, %v883, %v885
    %v887 = vsel %vm304, %v885, %v883
    %v888 = vmul.f32 %v887, %v51
    %v889 = vmul.f32 %v886, %v308
    %v890 = vpack.c.bf16 %v888, %v888
    %v891 = vpack.c.bf16 %v889, %v889
    %v893 = vsel %vm132, %v83, 0
    %v896 = vsel %vm136, %v890, 0
    %v899 = vsel %vm136, %v891, 0
    %901 = vmatprep.subr.bf16.mxu0 %v899
    %902 = vmatpush1.bf16.msra.mxu0 %v896
    %903 = vmatprep.subr.bf16.mxu0 0
    %904 = vmatpush1.bf16.msra.mxu0 0
    %905 = vmatprep.subr.bf16.mxu0 0
    %906 = vmatpush1.bf16.msra.mxu0 0
    %907 = vmatprep.subr.bf16.mxu0 0
    %908 = vmatpush1.bf16.msra.mxu0 0
    %909 = vmatprep.subr.bf16.mxu0 0
    %910 = vmatpush1.bf16.msra.mxu0 0
    %911 = vmatprep.subr.bf16.mxu0 0
    %912 = vmatpush1.bf16.msra.mxu0 0
    %913 = vmatprep.subr.bf16.mxu0 0
    %914 = vmatpush1.bf16.msra.mxu0 0
    %915 = vmatprep.subr.bf16.mxu0 0
    %916 = vmatpush1.bf16.msra.mxu0 0
    %917 = vmatprep.subr.bf16.mxu0 0
    %918 = vmatpush1.bf16.msra.mxu0 0
    %919 = vmatprep.subr.bf16.mxu0 0
    %920 = vmatpush1.bf16.msra.mxu0 0
    %921 = vmatprep.subr.bf16.mxu0 0
    %922 = vmatpush1.bf16.msra.mxu0 0
    %923 = vmatprep.subr.bf16.mxu0 0
    %924 = vmatpush1.bf16.msra.mxu0 0
    %925 = vmatprep.subr.bf16.mxu0 0
    %926 = vmatpush1.bf16.msra.mxu0 0
    %927 = vmatprep.subr.bf16.mxu0 0
    %928 = vmatpush1.bf16.msra.mxu0 0
    %929 = vmatprep.subr.bf16.mxu0 0
    %930 = vmatpush1.bf16.msra.mxu0 0
    %931 = vmatprep.subr.bf16.mxu0 0
    %932 = vmatpush1.bf16.msra.mxu0 0
    %933 = vmatprep.mubr.bf16.mxu0 0
    %934 = vmatmul.mubr.bf16.gmra.mrb[0].mxu0 %v893
    %v935 = vpop.f32.mrb[0].mxu0
    %v936 = vadd.f32 0.0, %v935
    %v937 = vpop.f32.mrb[0].mxu0
    %v938 = vadd.f32 0.0, %v937
    %v939 = vpop.f32.mrb[0].mxu0
    %v940 = vpop.f32.mrb[0].mxu0
    %941 = vdwg.mxu0
    %v942 = vadd.f32 %v880, %v936
    %v943 = vadd.f32 %v881, %v938
    %v944 = vpack.c.bf16 %v698, %v698
    %v945 = vpack.c.bf16 %v699, %v699
    %v947 = vsel %vm132, %v85, 0
    %v950 = vsel %vm136, %v944, 0
    %v953 = vsel %vm136, %v945, 0
    %955 = vmatprep.subr.bf16.mxu0 %v953
    %956 = vmatpush1.bf16.msra.mxu0 %v950
    %957 = vmatprep.subr.bf16.mxu0 0
    %958 = vmatpush1.bf16.msra.mxu0 0
    %959 = vmatprep.subr.bf16.mxu0 0
    %960 = vmatpush1.bf16.msra.mxu0 0
    %961 = vmatprep.subr.bf16.mxu0 0
    %962 = vmatpush1.bf16.msra.mxu0 0
    %963 = vmatprep.subr.bf16.mxu0 0
    %964 = vmatpush1.bf16.msra.mxu0 0
    %965 = vmatprep.subr.bf16.mxu0 0
    %966 = vmatpush1.bf16.msra.mxu0 0
    %967 = vmatprep.subr.bf16.mxu0 0
    %968 = vmatpush1.bf16.msra.mxu0 0
    %969 = vmatprep.subr.bf16.mxu0 0
    %970 = vmatpush1.bf16.msra.mxu0 0
    %971 = vmatprep.subr.bf16.mxu0 0
    %972 = vmatpush1.bf16.msra.mxu0 0
    %973 = vmatprep.subr.bf16.mxu0 0
    %974 = vmatpush1.bf16.msra.mxu0 0
    %975 = vmatprep.subr.bf16.mxu0 0
    %976 = vmatpush1.bf16.msra.mxu0 0
    %977 = vmatprep.subr.bf16.mxu0 0
    %978 = vmatpush1.bf16.msra.mxu0 0
    %979 = vmatprep.subr.bf16.mxu0 0
    %980 = vmatpush1.bf16.msra.mxu0 0
    %981 = vmatprep.subr.bf16.mxu0 0
    %982 = vmatpush1.bf16.msra.mxu0 0
    %983 = vmatprep.subr.bf16.mxu0 0
    %984 = vmatpush1.bf16.msra.mxu0 0
    %985 = vmatprep.subr.bf16.mxu0 0
    %986 = vmatpush1.bf16.msra.mxu0 0
    %987 = vmatprep.mubr.bf16.mxu0 0
    %988 = vmatmul.mubr.bf16.gmra.mrb[0].mxu0 %v947
    %v989 = vpop.f32.mrb[0].mxu0
    %v990 = vadd.f32 0.0, %v989
    %v991 = vpop.f32.mrb[0].mxu0
    %v992 = vadd.f32 0.0, %v991
    %v993 = vpop.f32.mrb[0].mxu0
    %v994 = vpop.f32.mrb[0].mxu0
    %995 = vdwg.mxu0
    %v996 = vadd.f32 %v942, %v990
    %v997 = vadd.f32 %v943, %v992
    %998 = vrot.lane.b32.xlu0 %v698, 127
    %v999 = vpop.permute.xlu0 %998
    %1000 = vrot.lane.b32.xlu0 %v699, 127
    %v1001 = vpop.permute.xlu0 %1000
    %v1002 = vsel %vm424, %v999, %v1001
    %v1003 = vsel %vm424, %v1001, %v999
    %v1004 = vmul.f32 %v1002, %v53
    %v1005 = vmul.f32 %v1003, %v428
    %v1006 = vpack.c.bf16 %v1004, %v1004
    %v1007 = vpack.c.bf16 %v1005, %v1005
    %v1009 = vsel %vm132, %v87, 0
    %v1012 = vsel %vm136, %v1006, 0
    %v1015 = vsel %vm136, %v1007, 0
    %1017 = vmatprep.subr.bf16.mxu0 %v1015
    %1018 = vmatpush1.bf16.msra.mxu0 %v1012
    %1019 = vmatprep.subr.bf16.mxu0 0
    %1020 = vmatpush1.bf16.msra.mxu0 0
    %1021 = vmatprep.subr.bf16.mxu0 0
    %1022 = vmatpush1.bf16.msra.mxu0 0
    %1023 = vmatprep.subr.bf16.mxu0 0
    %1024 = vmatpush1.bf16.msra.mxu0 0
    %1025 = vmatprep.subr.bf16.mxu0 0
    %1026 = vmatpush1.bf16.msra.mxu0 0
    %1027 = vmatprep.subr.bf16.mxu0 0
    %1028 = vmatpush1.bf16.msra.mxu0 0
    %1029 = vmatprep.subr.bf16.mxu0 0
    %1030 = vmatpush1.bf16.msra.mxu0 0
    %1031 = vmatprep.subr.bf16.mxu0 0
    %1032 = vmatpush1.bf16.msra.mxu0 0
    %1033 = vmatprep.subr.bf16.mxu0 0
    %1034 = vmatpush1.bf16.msra.mxu0 0
    %1035 = vmatprep.subr.bf16.mxu0 0
    %1036 = vmatpush1.bf16.msra.mxu0 0
    %1037 = vmatprep.subr.bf16.mxu0 0
    %1038 = vmatpush1.bf16.msra.mxu0 0
    %1039 = vmatprep.subr.bf16.mxu0 0
    %1040 = vmatpush1.bf16.msra.mxu0 0
    %1041 = vmatprep.subr.bf16.mxu0 0
    %1042 = vmatpush1.bf16.msra.mxu0 0
    %1043 = vmatprep.subr.bf16.mxu0 0
    %1044 = vmatpush1.bf16.msra.mxu0 0
    %1045 = vmatprep.subr.bf16.mxu0 0
    %1046 = vmatpush1.bf16.msra.mxu0 0
    %1047 = vmatprep.subr.bf16.mxu0 0
    %1048 = vmatpush1.bf16.msra.mxu0 0
    %1049 = vmatprep.mubr.bf16.mxu0 0
    %1050 = vmatmul.mubr.bf16.gmra.mrb[0].mxu0 %v1009
    %v1051 = vpop.f32.mrb[0].mxu0
    %v1052 = vadd.f32 0.0, %v1051
    %v1053 = vpop.f32.mrb[0].mxu0
    %v1054 = vadd.f32 0.0, %v1053
    %v1055 = vpop.f32.mrb[0].mxu0
    %v1056 = vpop.f32.mrb[0].mxu0
    %1057 = vdwg.mxu0
    %v1058 = vadd.f32 %v996, %v1052
    %v1059 = vadd.f32 %v997, %v1054
    %1060 = vrot.lane.b32.xlu0 %v698, 113
    %v1061 = vpop.permute.xlu0 %1060
    %1062 = vrot.lane.b32.xlu0 %v699, 113
    %v1063 = vpop.permute.xlu0 %1062
    %v1064 = vsel %vm490, %v1061, %v1063
    %v1065 = vsel %vm490, %v1063, %v1061
    %v1066 = vmul.f32 %v1064, %v55
    %v1067 = vmul.f32 %v1065, %v494
    %v1068 = vpack.c.bf16 %v1066, %v1066
    %v1069 = vpack.c.bf16 %v1067, %v1067
    %v1071 = vsel %vm132, %v89, 0
    %v1074 = vsel %vm136, %v1068, 0
    %v1077 = vsel %vm136, %v1069, 0
    %1079 = vmatprep.subr.bf16.mxu0 %v1077
    %1080 = vmatpush1.bf16.msra.mxu0 %v1074
    %1081 = vmatprep.subr.bf16.mxu0 0
    %1082 = vmatpush1.bf16.msra.mxu0 0
    %1083 = vmatprep.subr.bf16.mxu0 0
    %1084 = vmatpush1.bf16.msra.mxu0 0
    %1085 = vmatprep.subr.bf16.mxu0 0
    %1086 = vmatpush1.bf16.msra.mxu0 0
    %1087 = vmatprep.subr.bf16.mxu0 0
    %1088 = vmatpush1.bf16.msra.mxu0 0
    %1089 = vmatprep.subr.bf16.mxu0 0
    %1090 = vmatpush1.bf16.msra.mxu0 0
    %1091 = vmatprep.subr.bf16.mxu0 0
    %1092 = vmatpush1.bf16.msra.mxu0 0
    %1093 = vmatprep.subr.bf16.mxu0 0
    %1094 = vmatpush1.bf16.msra.mxu0 0
    %1095 = vmatprep.subr.bf16.mxu0 0
    %1096 = vmatpush1.bf16.msra.mxu0 0
    %1097 = vmatprep.subr.bf16.mxu0 0
    %1098 = vmatpush1.bf16.msra.mxu0 0
    %1099 = vmatprep.subr.bf16.mxu0 0
    %1100 = vmatpush1.bf16.msra.mxu0 0
    %1101 = vmatprep.subr.bf16.mxu0 0
    %1102 = vmatpush1.bf16.msra.mxu0 0
    %1103 = vmatprep.subr.bf16.mxu0 0
    %1104 = vmatpush1.bf16.msra.mxu0 0
    %1105 = vmatprep.subr.bf16.mxu0 0
    %1106 = vmatpush1.bf16.msra.mxu0 0
    %1107 = vmatprep.subr.bf16.mxu0 0
    %1108 = vmatpush1.bf16.msra.mxu0 0
    %1109 = vmatprep.subr.bf16.mxu0 0
    %1110 = vmatpush1.bf16.msra.mxu0 0
    %1111 = vmatprep.mubr.bf16.mxu0 0
    %1112 = vmatmul.mubr.bf16.gmra.mrb[0].mxu0 %v1071
    %v1113 = vpop.f32.mrb[0].mxu0
    %v1114 = vadd.f32 0.0, %v1113
    %v1115 = vpop.f32.mrb[0].mxu0
    %v1116 = vadd.f32 0.0, %v1115
    %v1117 = vpop.f32.mrb[0].mxu0
    %v1118 = vpop.f32.mrb[0].mxu0
    %1119 = vdwg.mxu0
    %v1120 = vadd.f32 %v1058, %v1114
    %v1121 = vadd.f32 %v1059, %v1116
    %1122 = vrot.lane.b32.xlu0 %v698, 112
    %v1123 = vpop.permute.xlu0 %1122
    %1124 = vrot.lane.b32.xlu0 %v699, 112
    %v1125 = vpop.permute.xlu0 %1124
    %v1126 = vsel %vm556, %v1123, %v1125
    %v1127 = vsel %vm556, %v1125, %v1123
    %v1128 = vmul.f32 %v1126, %v57
    %v1129 = vmul.f32 %v1127, %v560
    %v1130 = vpack.c.bf16 %v1128, %v1128
    %v1131 = vpack.c.bf16 %v1129, %v1129
    %v1133 = vsel %vm132, %v91, 0
    %v1136 = vsel %vm136, %v1130, 0
    %v1139 = vsel %vm136, %v1131, 0
    %1141 = vmatprep.subr.bf16.mxu0 %v1139
    %1142 = vmatpush1.bf16.msra.mxu0 %v1136
    %1143 = vmatprep.subr.bf16.mxu0 0
    %1144 = vmatpush1.bf16.msra.mxu0 0
    %1145 = vmatprep.subr.bf16.mxu0 0
    %1146 = vmatpush1.bf16.msra.mxu0 0
    %1147 = vmatprep.subr.bf16.mxu0 0
    %1148 = vmatpush1.bf16.msra.mxu0 0
    %1149 = vmatprep.subr.bf16.mxu0 0
    %1150 = vmatpush1.bf16.msra.mxu0 0
    %1151 = vmatprep.subr.bf16.mxu0 0
    %1152 = vmatpush1.bf16.msra.mxu0 0
    %1153 = vmatprep.subr.bf16.mxu0 0
    %1154 = vmatpush1.bf16.msra.mxu0 0
    %1155 = vmatprep.subr.bf16.mxu0 0
    %1156 = vmatpush1.bf16.msra.mxu0 0
    %1157 = vmatprep.subr.bf16.mxu0 0
    %1158 = vmatpush1.bf16.msra.mxu0 0
    %1159 = vmatprep.subr.bf16.mxu0 0
    %1160 = vmatpush1.bf16.msra.mxu0 0
    %1161 = vmatprep.subr.bf16.mxu0 0
    %1162 = vmatpush1.bf16.msra.mxu0 0
    %1163 = vmatprep.subr.bf16.mxu0 0
    %1164 = vmatpush1.bf16.msra.mxu0 0
    %1165 = vmatprep.subr.bf16.mxu0 0
    %1166 = vmatpush1.bf16.msra.mxu0 0
    %1167 = vmatprep.subr.bf16.mxu0 0
    %1168 = vmatpush1.bf16.msra.mxu0 0
    %1169 = vmatprep.subr.bf16.mxu0 0
    %1170 = vmatpush1.bf16.msra.mxu0 0
    %1171 = vmatprep.subr.bf16.mxu0 0
    %1172 = vmatpush1.bf16.msra.mxu0 0
    %1173 = vmatprep.mubr.bf16.mxu0 0
    %1174 = vmatmul.mubr.bf16.gmra.mrb[0].mxu0 %v1133
    %v1175 = vpop.f32.mrb[0].mxu0
    %v1176 = vadd.f32 0.0, %v1175
    %v1177 = vpop.f32.mrb[0].mxu0
    %v1178 = vadd.f32 0.0, %v1177
    %v1179 = vpop.f32.mrb[0].mxu0
    %v1180 = vpop.f32.mrb[0].mxu0
    %1181 = vdwg.mxu0
    %v1182 = vadd.f32 %v1120, %v1176
    %v1183 = vadd.f32 %v1121, %v1178
    %1184 = vrot.lane.b32.xlu0 %v698, 111
    %v1185 = vpop.permute.xlu0 %1184
    %1186 = vrot.lane.b32.xlu0 %v699, 111
    %v1187 = vpop.permute.xlu0 %1186
    %v1188 = vsel %vm622, %v1185, %v1187
    %v1189 = vsel %vm622, %v1187, %v1185
    %v1190 = vmul.f32 %v1188, %v59
    %v1191 = vmul.f32 %v1189, %v626
    %v1192 = vpack.c.bf16 %v1190, %v1190
    %v1193 = vpack.c.bf16 %v1191, %v1191
    %v1195 = vsel %vm132, %v93, 0
    %v1198 = vsel %vm136, %v1192, 0
    %v1201 = vsel %vm136, %v1193, 0
    %1203 = vmatprep.subr.bf16.mxu0 %v1201
    %1204 = vmatpush1.bf16.msra.mxu0 %v1198
    %1205 = vmatprep.subr.bf16.mxu0 0
    %1206 = vmatpush1.bf16.msra.mxu0 0
    %1207 = vmatprep.subr.bf16.mxu0 0
    %1208 = vmatpush1.bf16.msra.mxu0 0
    %1209 = vmatprep.subr.bf16.mxu0 0
    %1210 = vmatpush1.bf16.msra.mxu0 0
    %1211 = vmatprep.subr.bf16.mxu0 0
    %1212 = vmatpush1.bf16.msra.mxu0 0
    %1213 = vmatprep.subr.bf16.mxu0 0
    %1214 = vmatpush1.bf16.msra.mxu0 0
    %1215 = vmatprep.subr.bf16.mxu0 0
    %1216 = vmatpush1.bf16.msra.mxu0 0
    %1217 = vmatprep.subr.bf16.mxu0 0
    %1218 = vmatpush1.bf16.msra.mxu0 0
    %1219 = vmatprep.subr.bf16.mxu0 0
    %1220 = vmatpush1.bf16.msra.mxu0 0
    %1221 = vmatprep.subr.bf16.mxu0 0
    %1222 = vmatpush1.bf16.msra.mxu0 0
    %1223 = vmatprep.subr.bf16.mxu0 0
    %1224 = vmatpush1.bf16.msra.mxu0 0
    %1225 = vmatprep.subr.bf16.mxu0 0
    %1226 = vmatpush1.bf16.msra.mxu0 0
    %1227 = vmatprep.subr.bf16.mxu0 0
    %1228 = vmatpush1.bf16.msra.mxu0 0
    %1229 = vmatprep.subr.bf16.mxu0 0
    %1230 = vmatpush1.bf16.msra.mxu0 0
    %1231 = vmatprep.subr.bf16.mxu0 0
    %1232 = vmatpush1.bf16.msra.mxu0 0
    %1233 = vmatprep.subr.bf16.mxu0 0
    %1234 = vmatpush1.bf16.msra.mxu0 0
    %1235 = vmatprep.mubr.bf16.mxu0 0
    %1236 = vmatmul.mubr.bf16.gmra.mrb[0].mxu0 %v1195
    %v1237 = vpop.f32.mrb[0].mxu0
    %v1238 = vadd.f32 0.0, %v1237
    %v1239 = vpop.f32.mrb[0].mxu0
    %v1240 = vadd.f32 0.0, %v1239
    %v1241 = vpop.f32.mrb[0].mxu0
    %v1242 = vpop.f32.mrb[0].mxu0
    %1243 = vdwg.mxu0
    %v1244 = vadd.f32 %v1182, %v1238
    %v1245 = vadd.f32 %v1183, %v1240
    %1247 = vset.pattern.permute.xlu0 0
    %1248 = vperm.xlu0 %1247, %v96
    %v1249 = vpop.permute.xlu0 %1248
    %v1251 = vmul.f32 %v1244, %v1249
    %v1252 = vmul.f32 %v1245, %v1249
    %1254 = vset.pattern.permute.xlu0 0
    %1255 = vperm.xlu0 %1254, %v97
    %v1256 = vpop.permute.xlu0 %1255
    %v1258 = vadd.f32 %v1251, %v1256
    %v1259 = vadd.f32 %v1252, %v1256
    %v1260 = vadd.f32 %v1258, %v98
    %v1261 = vadd.f32 %v1259, %v100
    %v1262 = vmax.f32 %v1260, 0.0
    %v1263 = vmax.f32 %v1261, 0.0
    %v1266 = vcombine.low %v1262, %v1263
    %1268 = vst [vmem:[#allocation5] sm:$0xff] %v1266
    %s1269 = scalar_lea.vmem [#allocation2], 8
    %v1270 = vld [vmem:[%s1269] sm:$0xff]
    %v1272 = vcombine.high %v1270, %v1270
    %1274 = vrot.lane.b32.xlu0 %v1270, 17
    %v1275 = vpop.permute.xlu0 %1274
    %1276 = vrot.lane.b32.xlu0 %v1272, 17
    %v1277 = vpop.permute.xlu0 %1276
    %v1278 = vsel %vm108, %v1275, %v1277
    %v1279 = vsel %vm108, %v1277, %v1275
    %v1280 = vmul.f32 %v1279, %v45
    %v1281 = vmul.f32 %v1278, %v112
    %v1282 = vpack.c.bf16 %v1280, %v1280
    %v1283 = vpack.c.bf16 %v1281, %v1281
    %1284 = vrot.lane.b32.xlu0 %v1270, 16
    %v1285 = vpop.permute.xlu0 %1284
    %1286 = vrot.lane.b32.xlu0 %v1272, 16
    %v1287 = vpop.permute.xlu0 %1286
    %v1288 = vsel %vm122, %v1285, %v1287
    %v1289 = vsel %vm122, %v1287, %v1285
    %v1290 = vmul.f32 %v1289, %v47
    %v1291 = vmul.f32 %v1288, %v126
    %v1292 = vpack.c.bf16 %v1290, %v1290
    %v1293 = vpack.c.bf16 %v1291, %v1291
    %v1295 = vsel %vm136, %v1292, 0
    %v1298 = vsel %vm136, %v1293, 0
    %1300 = vmatprep.subr.bf16.mxu0 %v1298
    %1301 = vmatpush1.bf16.msra.mxu0 %v1295
    %1302 = vmatprep.subr.bf16.mxu0 0
    %1303 = vmatpush1.bf16.msra.mxu0 0
    %1304 = vmatprep.subr.bf16.mxu0 0
    %1305 = vmatpush1.bf16.msra.mxu0 0
    %1306 = vmatprep.subr.bf16.mxu0 0
    %1307 = vmatpush1.bf16.msra.mxu0 0
    %1308 = vmatprep.subr.bf16.mxu0 0
    %1309 = vmatpush1.bf16.msra.mxu0 0
    %1310 = vmatprep.subr.bf16.mxu0 0
    %1311 = vmatpush1.bf16.msra.mxu0 0
    %1312 = vmatprep.subr.bf16.mxu0 0
    %1313 = vmatpush1.bf16.msra.mxu0 0
    %1314 = vmatprep.subr.bf16.mxu0 0
    %1315 = vmatpush1.bf16.msra.mxu0 0
    %1316 = vmatprep.subr.bf16.mxu0 0
    %1317 = vmatpush1.bf16.msra.mxu0 0
    %1318 = vmatprep.subr.bf16.mxu0 0
    %1319 = vmatpush1.bf16.msra.mxu0 0
    %1320 = vmatprep.subr.bf16.mxu0 0
    %1321 = vmatpush1.bf16.msra.mxu0 0
    %1322 = vmatprep.subr.bf16.mxu0 0
    %1323 = vmatpush1.bf16.msra.mxu0 0
    %1324 = vmatprep.subr.bf16.mxu0 0
    %1325 = vmatpush1.bf16.msra.mxu0 0
    %1326 = vmatprep.subr.bf16.mxu0 0
    %1327 = vmatpush1.bf16.msra.mxu0 0
    %1328 = vmatprep.subr.bf16.mxu0 0
    %1329 = vmatpush1.bf16.msra.mxu0 0
    %1330 = vmatprep.subr.bf16.mxu0 0
    %1331 = vmatpush1.bf16.msra.mxu0 0
    %1332 = vmatprep.mubr.bf16.mxu0 0
    %1333 = vmatmul.mubr.bf16.gmra.mrb[0].mxu0 %v134
    %v1334 = vpop.f32.mrb[0].mxu0
    %v1335 = vadd.f32 0.0, %v1334
    %v1336 = vpop.f32.mrb[0].mxu0
    %v1337 = vadd.f32 0.0, %v1336
    %v1338 = vpop.f32.mrb[0].mxu0
    %v1339 = vpop.f32.mrb[0].mxu0
    %1340 = vdwg.mxu0
    %v1342 = vsel %vm136, %v1282, 0
    %v1345 = vsel %vm136, %v1283, 0
    %1347 = vmatprep.subr.bf16.mxu0 %v1345
    %1348 = vmatpush1.bf16.msra.mxu0 %v1342
    %1349 = vmatprep.subr.bf16.mxu0 0
    %1350 = vmatpush1.bf16.msra.mxu0 0
    %1351 = vmatprep.subr.bf16.mxu0 0
    %1352 = vmatpush1.bf16.msra.mxu0 0
    %1353 = vmatprep.subr.bf16.mxu0 0
    %1354 = vmatpush1.bf16.msra.mxu0 0
    %1355 = vmatprep.subr.bf16.mxu0 0
    %1356 = vmatpush1.bf16.msra.mxu0 0
    %1357 = vmatprep.subr.bf16.mxu0 0
    %1358 = vmatpush1.bf16.msra.mxu0 0
    %1359 = vmatprep.subr.bf16.mxu0 0
    %1360 = vmatpush1.bf16.msra.mxu0 0
    %1361 = vmatprep.subr.bf16.mxu0 0
    %1362 = vmatpush1.bf16.msra.mxu0 0
    %1363 = vmatprep.subr.bf16.mxu0 0
    %1364 = vmatpush1.bf16.msra.mxu0 0
    %1365 = vmatprep.subr.bf16.mxu0 0
    %1366 = vmatpush1.bf16.msra.mxu0 0
    %1367 = vmatprep.subr.bf16.mxu0 0
    %1368 = vmatpush1.bf16.msra.mxu0 0
    %1369 = vmatprep.subr.bf16.mxu0 0
    %1370 = vmatpush1.bf16.msra.mxu0 0
    %1371 = vmatprep.subr.bf16.mxu0 0
    %1372 = vmatpush1.bf16.msra.mxu0 0
    %1373 = vmatprep.subr.bf16.mxu0 0
    %1374 = vmatpush1.bf16.msra.mxu0 0
    %1375 = vmatprep.subr.bf16.mxu0 0
    %1376 = vmatpush1.bf16.msra.mxu0 0
    %1377 = vmatprep.subr.bf16.mxu0 0
    %1378 = vmatpush1.bf16.msra.mxu0 0
    %1379 = vmatprep.mubr.bf16.mxu0 0
    %1380 = vmatmul.mubr.bf16.gmra.mrb[0].mxu0 %v185
    %v1381 = vpop.f32.mrb[0].mxu0
    %v1382 = vadd.f32 %v1335, %v1381
    %v1383 = vpop.f32.mrb[0].mxu0
    %v1384 = vadd.f32 %v1337, %v1383
    %v1385 = vpop.f32.mrb[0].mxu0
    %v1386 = vpop.f32.mrb[0].mxu0
    %1387 = vdwg.mxu0
    %1388 = vrot.lane.b32.xlu0 %v1270, 15
    %v1389 = vpop.permute.xlu0 %1388
    %1390 = vrot.lane.b32.xlu0 %v1272, 15
    %v1391 = vpop.permute.xlu0 %1390
    %v1392 = vsel %vm238, %v1389, %v1391
    %v1393 = vsel %vm238, %v1391, %v1389
    %v1394 = vmul.f32 %v1393, %v49
    %v1395 = vmul.f32 %v1392, %v242
    %v1396 = vpack.c.bf16 %v1394, %v1394
    %v1397 = vpack.c.bf16 %v1395, %v1395
    %v1399 = vsel %vm136, %v1396, 0
    %v1402 = vsel %vm136, %v1397, 0
    %1404 = vmatprep.subr.bf16.mxu0 %v1402
    %1405 = vmatpush1.bf16.msra.mxu0 %v1399
    %1406 = vmatprep.subr.bf16.mxu0 0
    %1407 = vmatpush1.bf16.msra.mxu0 0
    %1408 = vmatprep.subr.bf16.mxu0 0
    %1409 = vmatpush1.bf16.msra.mxu0 0
    %1410 = vmatprep.subr.bf16.mxu0 0
    %1411 = vmatpush1.bf16.msra.mxu0 0
    %1412 = vmatprep.subr.bf16.mxu0 0
    %1413 = vmatpush1.bf16.msra.mxu0 0
    %1414 = vmatprep.subr.bf16.mxu0 0
    %1415 = vmatpush1.bf16.msra.mxu0 0
    %1416 = vmatprep.subr.bf16.mxu0 0
    %1417 = vmatpush1.bf16.msra.mxu0 0
    %1418 = vmatprep.subr.bf16.mxu0 0
    %1419 = vmatpush1.bf16.msra.mxu0 0
    %1420 = vmatprep.subr.bf16.mxu0 0
    %1421 = vmatpush1.bf16.msra.mxu0 0
    %1422 = vmatprep.subr.bf16.mxu0 0
    %1423 = vmatpush1.bf16.msra.mxu0 0
    %1424 = vmatprep.subr.bf16.mxu0 0
    %1425 = vmatpush1.bf16.msra.mxu0 0
    %1426 = vmatprep.subr.bf16.mxu0 0
    %1427 = vmatpush1.bf16.msra.mxu0 0
    %1428 = vmatprep.subr.bf16.mxu0 0
    %1429 = vmatpush1.bf16.msra.mxu0 0
    %1430 = vmatprep.subr.bf16.mxu0 0
    %1431 = vmatpush1.bf16.msra.mxu0 0
    %1432 = vmatprep.subr.bf16.mxu0 0
    %1433 = vmatpush1.bf16.msra.mxu0 0
    %1434 = vmatprep.subr.bf16.mxu0 0
    %1435 = vmatpush1.bf16.msra.mxu0 0
    %1436 = vmatprep.mubr.bf16.mxu0 0
    %1437 = vmatmul.mubr.bf16.gmra.mrb[0].mxu0 %v249
    %v1438 = vpop.f32.mrb[0].mxu0
    %v1439 = vadd.f32 0.0, %v1438
    %v1440 = vpop.f32.mrb[0].mxu0
    %v1441 = vadd.f32 0.0, %v1440
    %v1442 = vpop.f32.mrb[0].mxu0
    %v1443 = vpop.f32.mrb[0].mxu0
    %1444 = vdwg.mxu0
    %v1445 = vadd.f32 %v1382, %v1439
    %v1446 = vadd.f32 %v1384, %v1441
    %1447 = vrot.lane.b32.xlu0 %v1270, 1
    %v1448 = vpop.permute.xlu0 %1447
    %1449 = vrot.lane.b32.xlu0 %v1272, 1
    %v1450 = vpop.permute.xlu0 %1449
    %v1451 = vsel %vm304, %v1448, %v1450
    %v1452 = vsel %vm304, %v1450, %v1448
    %v1453 = vmul.f32 %v1452, %v51
    %v1454 = vmul.f32 %v1451, %v308
    %v1455 = vpack.c.bf16 %v1453, %v1453
    %v1456 = vpack.c.bf16 %v1454, %v1454
    %v1458 = vsel %vm136, %v1455, 0
    %v1461 = vsel %vm136, %v1456, 0
    %1463 = vmatprep.subr.bf16.mxu0 %v1461
    %1464 = vmatpush1.bf16.msra.mxu0 %v1458
    %1465 = vmatprep.subr.bf16.mxu0 0
    %1466 = vmatpush1.bf16.msra.mxu0 0
    %1467 = vmatprep.subr.bf16.mxu0 0
    %1468 = vmatpush1.bf16.msra.mxu0 0
    %1469 = vmatprep.subr.bf16.mxu0 0
    %1470 = vmatpush1.bf16.msra.mxu0 0
    %1471 = vmatprep.subr.bf16.mxu0 0
    %1472 = vmatpush1.bf16.msra.mxu0 0
    %1473 = vmatprep.subr.bf16.mxu0 0
    %1474 = vmatpush1.bf16.msra.mxu0 0
    %1475 = vmatprep.subr.bf16.mxu0 0
    %1476 = vmatpush1.bf16.msra.mxu0 0
    %1477 = vmatprep.subr.bf16.mxu0 0
    %1478 = vmatpush1.bf16.msra.mxu0 0
    %1479 = vmatprep.subr.bf16.mxu0 0
    %1480 = vmatpush1.bf16.msra.mxu0 0
    %1481 = vmatprep.subr.bf16.mxu0 0
    %1482 = vmatpush1.bf16.msra.mxu0 0
    %1483 = vmatprep.subr.bf16.mxu0 0
    %1484 = vmatpush1.bf16.msra.mxu0 0
    %1485 = vmatprep.subr.bf16.mxu0 0
    %1486 = vmatpush1.bf16.msra.mxu0 0
    %1487 = vmatprep.subr.bf16.mxu0 0
    %1488 = vmatpush1.bf16.msra.mxu0 0
    %1489 = vmatprep.subr.bf16.mxu0 0
    %1490 = vmatpush1.bf16.msra.mxu0 0
    %1491 = vmatprep.subr.bf16.mxu0 0
    %1492 = vmatpush1.bf16.msra.mxu0 0
    %1493 = vmatprep.subr.bf16.mxu0 0
    %1494 = vmatpush1.bf16.msra.mxu0 0
    %1495 = vmatprep.mubr.bf16.mxu0 0
    %1496 = vmatmul.mubr.bf16.gmra.mrb[0].mxu0 %v315
    %v1497 = vpop.f32.mrb[0].mxu0
    %v1498 = vadd.f32 0.0, %v1497
    %v1499 = vpop.f32.mrb[0].mxu0
    %v1500 = vadd.f32 0.0, %v1499
    %v1501 = vpop.f32.mrb[0].mxu0
    %v1502 = vpop.f32.mrb[0].mxu0
    %1503 = vdwg.mxu0
    %v1504 = vadd.f32 %v1445, %v1498
    %v1505 = vadd.f32 %v1446, %v1500
    %v1506 = vpack.c.bf16 %v1270, %v1270
    %v1507 = vpack.c.bf16 %v1272, %v1272
    %v1509 = vsel %vm136, %v1506, 0
    %v1512 = vsel %vm136, %v1507, 0
    %1514 = vmatprep.subr.bf16.mxu0 %v1512
    %1515 = vmatpush1.bf16.msra.mxu0 %v1509
    %1516 = vmatprep.subr.bf16.mxu0 0
    %1517 = vmatpush1.bf16.msra.mxu0 0
    %1518 = vmatprep.subr.bf16.mxu0 0
    %1519 = vmatpush1.bf16.msra.mxu0 0
    %1520 = vmatprep.subr.bf16.mxu0 0
    %1521 = vmatpush1.bf16.msra.mxu0 0
    %1522 = vmatprep.subr.bf16.mxu0 0
    %1523 = vmatpush1.bf16.msra.mxu0 0
    %1524 = vmatprep.subr.bf16.mxu0 0
    %1525 = vmatpush1.bf16.msra.mxu0 0
    %1526 = vmatprep.subr.bf16.mxu0 0
    %1527 = vmatpush1.bf16.msra.mxu0 0
    %1528 = vmatprep.subr.bf16.mxu0 0
    %1529 = vmatpush1.bf16.msra.mxu0 0
    %1530 = vmatprep.subr.bf16.mxu0 0
    %1531 = vmatpush1.bf16.msra.mxu0 0
    %1532 = vmatprep.subr.bf16.mxu0 0
    %1533 = vmatpush1.bf16.msra.mxu0 0
    %1534 = vmatprep.subr.bf16.mxu0 0
    %1535 = vmatpush1.bf16.msra.mxu0 0
    %1536 = vmatprep.subr.bf16.mxu0 0
    %1537 = vmatpush1.bf16.msra.mxu0 0
    %1538 = vmatprep.subr.bf16.mxu0 0
    %1539 = vmatpush1.bf16.msra.mxu0 0
    %1540 = vmatprep.subr.bf16.mxu0 0
    %1541 = vmatpush1.bf16.msra.mxu0 0
    %1542 = vmatprep.subr.bf16.mxu0 0
    %1543 = vmatpush1.bf16.msra.mxu0 0
    %1544 = vmatprep.subr.bf16.mxu0 0
    %1545 = vmatpush1.bf16.msra.mxu0 0
    %1546 = vmatprep.mubr.bf16.mxu0 0
    %1547 = vmatmul.mubr.bf16.gmra.mrb[0].mxu0 %v369
    %v1548 = vpop.f32.mrb[0].mxu0
    %v1549 = vadd.f32 0.0, %v1548
    %v1550 = vpop.f32.mrb[0].mxu0
    %v1551 = vadd.f32 0.0, %v1550
    %v1552 = vpop.f32.mrb[0].mxu0
    %v1553 = vpop.f32.mrb[0].mxu0
    %1554 = vdwg.mxu0
    %v1555 = vadd.f32 %v1504, %v1549
    %v1556 = vadd.f32 %v1505, %v1551
    %1557 = vrot.lane.b32.xlu0 %v1270, 127
    %v1558 = vpop.permute.xlu0 %1557
    %1559 = vrot.lane.b32.xlu0 %v1272, 127
    %v1560 = vpop.permute.xlu0 %1559
    %v1561 = vsel %vm424, %v1558, %v1560
    %v1562 = vsel %vm424, %v1560, %v1558
    %v1563 = vmul.f32 %v1561, %v53
    %v1564 = vmul.f32 %v1562, %v428
    %v1565 = vpack.c.bf16 %v1563, %v1563
    %v1566 = vpack.c.bf16 %v1564, %v1564
    %v1568 = vsel %vm136, %v1565, 0
    %v1571 = vsel %vm136, %v1566, 0
    %1573 = vmatprep.subr.bf16.mxu0 %v1571
    %1574 = vmatpush1.bf16.msra.mxu0 %v1568
    %1575 = vmatprep.subr.bf16.mxu0 0
    %1576 = vmatpush1.bf16.msra.mxu0 0
    %1577 = vmatprep.subr.bf16.mxu0 0
    %1578 = vmatpush1.bf16.msra.mxu0 0
    %1579 = vmatprep.subr.bf16.mxu0 0
    %1580 = vmatpush1.bf16.msra.mxu0 0
    %1581 = vmatprep.subr.bf16.mxu0 0
    %1582 = vmatpush1.bf16.msra.mxu0 0
    %1583 = vmatprep.subr.bf16.mxu0 0
    %1584 = vmatpush1.bf16.msra.mxu0 0
    %1585 = vmatprep.subr.bf16.mxu0 0
    %1586 = vmatpush1.bf16.msra.mxu0 0
    %1587 = vmatprep.subr.bf16.mxu0 0
    %1588 = vmatpush1.bf16.msra.mxu0 0
    %1589 = vmatprep.subr.bf16.mxu0 0
    %1590 = vmatpush1.bf16.msra.mxu0 0
    %1591 = vmatprep.subr.bf16.mxu0 0
    %1592 = vmatpush1.bf16.msra.mxu0 0
    %1593 = vmatprep.subr.bf16.mxu0 0
    %1594 = vmatpush1.bf16.msra.mxu0 0
    %1595 = vmatprep.subr.bf16.mxu0 0
    %1596 = vmatpush1.bf16.msra.mxu0 0
    %1597 = vmatprep.subr.bf16.mxu0 0
    %1598 = vmatpush1.bf16.msra.mxu0 0
    %1599 = vmatprep.subr.bf16.mxu0 0
    %1600 = vmatpush1.bf16.msra.mxu0 0
    %1601 = vmatprep.subr.bf16.mxu0 0
    %1602 = vmatpush1.bf16.msra.mxu0 0
    %1603 = vmatprep.subr.bf16.mxu0 0
    %1604 = vmatpush1.bf16.msra.mxu0 0
    %1605 = vmatprep.mubr.bf16.mxu0 0
    %1606 = vmatmul.mubr.bf16.gmra.mrb[0].mxu0 %v435
    %v1607 = vpop.f32.mrb[0].mxu0
    %v1608 = vadd.f32 0.0, %v1607
    %v1609 = vpop.f32.mrb[0].mxu0
    %v1610 = vadd.f32 0.0, %v1609
    %v1611 = vpop.f32.mrb[0].mxu0
    %v1612 = vpop.f32.mrb[0].mxu0
    %1613 = vdwg.mxu0
    %v1614 = vadd.f32 %v1555, %v1608
    %v1615 = vadd.f32 %v1556, %v1610
    %1616 = vrot.lane.b32.xlu0 %v1270, 113
    %v1617 = vpop.permute.xlu0 %1616
    %1618 = vrot.lane.b32.xlu0 %v1272, 113
    %v1619 = vpop.permute.xlu0 %1618
    %v1620 = vsel %vm490, %v1617, %v1619
    %v1621 = vsel %vm490, %v1619, %v1617
    %v1622 = vmul.f32 %v1620, %v55
    %v1623 = vmul.f32 %v1621, %v494
    %v1624 = vpack.c.bf16 %v1622, %v1622
    %v1625 = vpack.c.bf16 %v1623, %v1623
    %v1627 = vsel %vm136, %v1624, 0
    %v1630 = vsel %vm136, %v1625, 0
    %1632 = vmatprep.subr.bf16.mxu0 %v1630
    %1633 = vmatpush1.bf16.msra.mxu0 %v1627
    %1634 = vmatprep.subr.bf16.mxu0 0
    %1635 = vmatpush1.bf16.msra.mxu0 0
    %1636 = vmatprep.subr.bf16.mxu0 0
    %1637 = vmatpush1.bf16.msra.mxu0 0
    %1638 = vmatprep.subr.bf16.mxu0 0
    %1639 = vmatpush1.bf16.msra.mxu0 0
    %1640 = vmatprep.subr.bf16.mxu0 0
    %1641 = vmatpush1.bf16.msra.mxu0 0
    %1642 = vmatprep.subr.bf16.mxu0 0
    %1643 = vmatpush1.bf16.msra.mxu0 0
    %1644 = vmatprep.subr.bf16.mxu0 0
    %1645 = vmatpush1.bf16.msra.mxu0 0
    %1646 = vmatprep.subr.bf16.mxu0 0
    %1647 = vmatpush1.bf16.msra.mxu0 0
    %1648 = vmatprep.subr.bf16.mxu0 0
    %1649 = vmatpush1.bf16.msra.mxu0 0
    %1650 = vmatprep.subr.bf16.mxu0 0
    %1651 = vmatpush1.bf16.msra.mxu0 0
    %1652 = vmatprep.subr.bf16.mxu0 0
    %1653 = vmatpush1.bf16.msra.mxu0 0
    %1654 = vmatprep.subr.bf16.mxu0 0
    %1655 = vmatpush1.bf16.msra.mxu0 0
    %1656 = vmatprep.subr.bf16.mxu0 0
    %1657 = vmatpush1.bf16.msra.mxu0 0
    %1658 = vmatprep.subr.bf16.mxu0 0
    %1659 = vmatpush1.bf16.msra.mxu0 0
    %1660 = vmatprep.subr.bf16.mxu0 0
    %1661 = vmatpush1.bf16.msra.mxu0 0
    %1662 = vmatprep.subr.bf16.mxu0 0
    %1663 = vmatpush1.bf16.msra.mxu0 0
    %1664 = vmatprep.mubr.bf16.mxu0 0
    %1665 = vmatmul.mubr.bf16.gmra.mrb[0].mxu0 %v501
    %v1666 = vpop.f32.mrb[0].mxu0
    %v1667 = vadd.f32 0.0, %v1666
    %v1668 = vpop.f32.mrb[0].mxu0
    %v1669 = vadd.f32 0.0, %v1668
    %v1670 = vpop.f32.mrb[0].mxu0
    %v1671 = vpop.f32.mrb[0].mxu0
    %1672 = vdwg.mxu0
    %v1673 = vadd.f32 %v1614, %v1667
    %v1674 = vadd.f32 %v1615, %v1669
    %1675 = vrot.lane.b32.xlu0 %v1270, 112
    %v1676 = vpop.permute.xlu0 %1675
    %1677 = vrot.lane.b32.xlu0 %v1272, 112
    %v1678 = vpop.permute.xlu0 %1677
    %v1679 = vsel %vm556, %v1676, %v1678
    %v1680 = vsel %vm556, %v1678, %v1676
    %v1681 = vmul.f32 %v1679, %v57
    %v1682 = vmul.f32 %v1680, %v560
    %v1683 = vpack.c.bf16 %v1681, %v1681
    %v1684 = vpack.c.bf16 %v1682, %v1682
    %v1686 = vsel %vm136, %v1683, 0
    %v1689 = vsel %vm136, %v1684, 0
    %1691 = vmatprep.subr.bf16.mxu0 %v1689
    %1692 = vmatpush1.bf16.msra.mxu0 %v1686
    %1693 = vmatprep.subr.bf16.mxu0 0
    %1694 = vmatpush1.bf16.msra.mxu0 0
    %1695 = vmatprep.subr.bf16.mxu0 0
    %1696 = vmatpush1.bf16.msra.mxu0 0
    %1697 = vmatprep.subr.bf16.mxu0 0
    %1698 = vmatpush1.bf16.msra.mxu0 0
    %1699 = vmatprep.subr.bf16.mxu0 0
    %1700 = vmatpush1.bf16.msra.mxu0 0
    %1701 = vmatprep.subr.bf16.mxu0 0
    %1702 = vmatpush1.bf16.msra.mxu0 0
    %1703 = vmatprep.subr.bf16.mxu0 0
    %1704 = vmatpush1.bf16.msra.mxu0 0
    %1705 = vmatprep.subr.bf16.mxu0 0
    %1706 = vmatpush1.bf16.msra.mxu0 0
    %1707 = vmatprep.subr.bf16.mxu0 0
    %1708 = vmatpush1.bf16.msra.mxu0 0
    %1709 = vmatprep.subr.bf16.mxu0 0
    %1710 = vmatpush1.bf16.msra.mxu0 0
    %1711 = vmatprep.subr.bf16.mxu0 0
    %1712 = vmatpush1.bf16.msra.mxu0 0
    %1713 = vmatprep.subr.bf16.mxu0 0
    %1714 = vmatpush1.bf16.msra.mxu0 0
    %1715 = vmatprep.subr.bf16.mxu0 0
    %1716 = vmatpush1.bf16.msra.mxu0 0
    %1717 = vmatprep.subr.bf16.mxu0 0
    %1718 = vmatpush1.bf16.msra.mxu0 0
    %1719 = vmatprep.subr.bf16.mxu0 0
    %1720 = vmatpush1.bf16.msra.mxu0 0
    %1721 = vmatprep.subr.bf16.mxu0 0
    %1722 = vmatpush1.bf16.msra.mxu0 0
    %1723 = vmatprep.mubr.bf16.mxu0 0
    %1724 = vmatmul.mubr.bf16.gmra.mrb[0].mxu0 %v567
    %v1725 = vpop.f32.mrb[0].mxu0
    %v1726 = vadd.f32 0.0, %v1725
    %v1727 = vpop.f32.mrb[0].mxu0
    %v1728 = vadd.f32 0.0, %v1727
    %v1729 = vpop.f32.mrb[0].mxu0
    %v1730 = vpop.f32.mrb[0].mxu0
    %1731 = vdwg.mxu0
    %v1732 = vadd.f32 %v1673, %v1726
    %v1733 = vadd.f32 %v1674, %v1728
    %1734 = vrot.lane.b32.xlu0 %v1270, 111
    %v1735 = vpop.permute.xlu0 %1734
    %1736 = vrot.lane.b32.xlu0 %v1272, 111
    %v1737 = vpop.permute.xlu0 %1736
    %v1738 = vsel %vm622, %v1735, %v1737
    %v1739 = vsel %vm622, %v1737, %v1735
    %v1740 = vmul.f32 %v1738, %v59
    %v1741 = vmul.f32 %v1739, %v626
    %v1742 = vpack.c.bf16 %v1740, %v1740
    %v1743 = vpack.c.bf16 %v1741, %v1741
    %v1745 = vsel %vm136, %v1742, 0
    %v1748 = vsel %vm136, %v1743, 0
    %1750 = vmatprep.subr.bf16.mxu0 %v1748
    %1751 = vmatpush1.bf16.msra.mxu0 %v1745
    %1752 = vmatprep.subr.bf16.mxu0 0
    %1753 = vmatpush1.bf16.msra.mxu0 0
    %1754 = vmatprep.subr.bf16.mxu0 0
    %1755 = vmatpush1.bf16.msra.mxu0 0
    %1756 = vmatprep.subr.bf16.mxu0 0
    %1757 = vmatpush1.bf16.msra.mxu0 0
    %1758 = vmatprep.subr.bf16.mxu0 0
    %1759 = vmatpush1.bf16.msra.mxu0 0
    %1760 = vmatprep.subr.bf16.mxu0 0
    %1761 = vmatpush1.bf16.msra.mxu0 0
    %1762 = vmatprep.subr.bf16.mxu0 0
    %1763 = vmatpush1.bf16.msra.mxu0 0
    %1764 = vmatprep.subr.bf16.mxu0 0
    %1765 = vmatpush1.bf16.msra.mxu0 0
    %1766 = vmatprep.subr.bf16.mxu0 0
    %1767 = vmatpush1.bf16.msra.mxu0 0
    %1768 = vmatprep.subr.bf16.mxu0 0
    %1769 = vmatpush1.bf16.msra.mxu0 0
    %1770 = vmatprep.subr.bf16.mxu0 0
    %1771 = vmatpush1.bf16.msra.mxu0 0
    %1772 = vmatprep.subr.bf16.mxu0 0
    %1773 = vmatpush1.bf16.msra.mxu0 0
    %1774 = vmatprep.subr.bf16.mxu0 0
    %1775 = vmatpush1.bf16.msra.mxu0 0
    %1776 = vmatprep.subr.bf16.mxu0 0
    %1777 = vmatpush1.bf16.msra.mxu0 0
    %1778 = vmatprep.subr.bf16.mxu0 0
    %1779 = vmatpush1.bf16.msra.mxu0 0
    %1780 = vmatprep.subr.bf16.mxu0 0
    %1781 = vmatpush1.bf16.msra.mxu0 0
    %1782 = vmatprep.mubr.bf16.mxu0 0
    %1783 = vmatmul.mubr.bf16.gmra.mrb[0].mxu0 %v633
    %v1784 = vpop.f32.mrb[0].mxu0
    %v1785 = vadd.f32 0.0, %v1784
    %v1786 = vpop.f32.mrb[0].mxu0
    %v1787 = vadd.f32 0.0, %v1786
    %v1788 = vpop.f32.mrb[0].mxu0
    %v1789 = vpop.f32.mrb[0].mxu0
    %1790 = vdwg.mxu0
    %v1791 = vadd.f32 %v1732, %v1785
    %v1792 = vadd.f32 %v1733, %v1787
    %v1793 = vmul.f32 %v1791, %v687
    %v1794 = vmul.f32 %v1792, %v687
    %v1795 = vadd.f32 %v1793, %v694
    %v1796 = vadd.f32 %v1794, %v694
    %v1797 = vmax.f32 %v1795, 0.0
    %v1798 = vmax.f32 %v1796, 0.0
    %1799 = vrot.lane.b32.xlu0 %v1797, 17
    %v1800 = vpop.permute.xlu0 %1799
    %1801 = vrot.lane.b32.xlu0 %v1798, 17
    %v1802 = vpop.permute.xlu0 %1801
    %v1803 = vsel %vm108, %v1800, %v1802
    %v1804 = vsel %vm108, %v1802, %v1800
    %v1805 = vmul.f32 %v1804, %v45
    %v1806 = vmul.f32 %v1803, %v112
    %v1807 = vpack.c.bf16 %v1805, %v1805
    %v1808 = vpack.c.bf16 %v1806, %v1806
    %1809 = vrot.lane.b32.xlu0 %v1797, 16
    %v1810 = vpop.permute.xlu0 %1809
    %1811 = vrot.lane.b32.xlu0 %v1798, 16
    %v1812 = vpop.permute.xlu0 %1811
    %v1813 = vsel %vm122, %v1810, %v1812
    %v1814 = vsel %vm122, %v1812, %v1810
    %v1815 = vmul.f32 %v1814, %v47
    %v1816 = vmul.f32 %v1813, %v126
    %v1817 = vpack.c.bf16 %v1815, %v1815
    %v1818 = vpack.c.bf16 %v1816, %v1816
    %v1820 = vsel %vm136, %v1817, 0
    %v1823 = vsel %vm136, %v1818, 0
    %1825 = vmatprep.subr.bf16.mxu0 %v1823
    %1826 = vmatpush1.bf16.msra.mxu0 %v1820
    %1827 = vmatprep.subr.bf16.mxu0 0
    %1828 = vmatpush1.bf16.msra.mxu0 0
    %1829 = vmatprep.subr.bf16.mxu0 0
    %1830 = vmatpush1.bf16.msra.mxu0 0
    %1831 = vmatprep.subr.bf16.mxu0 0
    %1832 = vmatpush1.bf16.msra.mxu0 0
    %1833 = vmatprep.subr.bf16.mxu0 0
    %1834 = vmatpush1.bf16.msra.mxu0 0
    %1835 = vmatprep.subr.bf16.mxu0 0
    %1836 = vmatpush1.bf16.msra.mxu0 0
    %1837 = vmatprep.subr.bf16.mxu0 0
    %1838 = vmatpush1.bf16.msra.mxu0 0
    %1839 = vmatprep.subr.bf16.mxu0 0
    %1840 = vmatpush1.bf16.msra.mxu0 0
    %1841 = vmatprep.subr.bf16.mxu0 0
    %1842 = vmatpush1.bf16.msra.mxu0 0
    %1843 = vmatprep.subr.bf16.mxu0 0
    %1844 = vmatpush1.bf16.msra.mxu0 0
    %1845 = vmatprep.subr.bf16.mxu0 0
    %1846 = vmatpush1.bf16.msra.mxu0 0
    %1847 = vmatprep.subr.bf16.mxu0 0
    %1848 = vmatpush1.bf16.msra.mxu0 0
    %1849 = vmatprep.subr.bf16.mxu0 0
    %1850 = vmatpush1.bf16.msra.mxu0 0
    %1851 = vmatprep.subr.bf16.mxu0 0
    %1852 = vmatpush1.bf16.msra.mxu0 0
    %1853 = vmatprep.subr.bf16.mxu0 0
    %1854 = vmatpush1.bf16.msra.mxu0 0
    %1855 = vmatprep.subr.bf16.mxu0 0
    %1856 = vmatpush1.bf16.msra.mxu0 0
    %1857 = vmatprep.mubr.bf16.mxu0 0
    %1858 = vmatmul.mubr.bf16.gmra.mrb[0].mxu0 %v721
    %v1859 = vpop.f32.mrb[0].mxu0
    %v1860 = vadd.f32 0.0, %v1859
    %v1861 = vpop.f32.mrb[0].mxu0
    %v1862 = vadd.f32 0.0, %v1861
    %v1863 = vpop.f32.mrb[0].mxu0
    %v1864 = vpop.f32.mrb[0].mxu0
    %1865 = vdwg.mxu0
    %v1867 = vsel %vm136, %v1807, 0
    %v1870 = vsel %vm136, %v1808, 0
    %1872 = vmatprep.subr.bf16.mxu0 %v1870
    %1873 = vmatpush1.bf16.msra.mxu0 %v1867
    %1874 = vmatprep.subr.bf16.mxu0 0
    %1875 = vmatpush1.bf16.msra.mxu0 0
    %1876 = vmatprep.subr.bf16.mxu0 0
    %1877 = vmatpush1.bf16.msra.mxu0 0
    %1878 = vmatprep.subr.bf16.mxu0 0
    %1879 = vmatpush1.bf16.msra.mxu0 0
    %1880 = vmatprep.subr.bf16.mxu0 0
    %1881 = vmatpush1.bf16.msra.mxu0 0
    %1882 = vmatprep.subr.bf16.mxu0 0
    %1883 = vmatpush1.bf16.msra.mxu0 0
    %1884 = vmatprep.subr.bf16.mxu0 0
    %1885 = vmatpush1.bf16.msra.mxu0 0
    %1886 = vmatprep.subr.bf16.mxu0 0
    %1887 = vmatpush1.bf16.msra.mxu0 0
    %1888 = vmatprep.subr.bf16.mxu0 0
    %1889 = vmatpush1.bf16.msra.mxu0 0
    %1890 = vmatprep.subr.bf16.mxu0 0
    %1891 = vmatpush1.bf16.msra.mxu0 0
    %1892 = vmatprep.subr.bf16.mxu0 0
    %1893 = vmatpush1.bf16.msra.mxu0 0
    %1894 = vmatprep.subr.bf16.mxu0 0
    %1895 = vmatpush1.bf16.msra.mxu0 0
    %1896 = vmatprep.subr.bf16.mxu0 0
    %1897 = vmatpush1.bf16.msra.mxu0 0
    %1898 = vmatprep.subr.bf16.mxu0 0
    %1899 = vmatpush1.bf16.msra.mxu0 0
    %1900 = vmatprep.subr.bf16.mxu0 0
    %1901 = vmatpush1.bf16.msra.mxu0 0
    %1902 = vmatprep.subr.bf16.mxu0 0
    %1903 = vmatpush1.bf16.msra.mxu0 0
    %1904 = vmatprep.mubr.bf16.mxu0 0
    %1905 = vmatmul.mubr.bf16.gmra.mrb[0].mxu0 %v771
    %v1906 = vpop.f32.mrb[0].mxu0
    %v1907 = vadd.f32 %v1860, %v1906
    %v1908 = vpop.f32.mrb[0].mxu0
    %v1909 = vadd.f32 %v1862, %v1908
    %v1910 = vpop.f32.mrb[0].mxu0
    %v1911 = vpop.f32.mrb[0].mxu0
    %1912 = vdwg.mxu0
    %1913 = vrot.lane.b32.xlu0 %v1797, 15
    %v1914 = vpop.permute.xlu0 %1913
    %1915 = vrot.lane.b32.xlu0 %v1798, 15
    %v1916 = vpop.permute.xlu0 %1915
    %v1917 = vsel %vm238, %v1914, %v1916
    %v1918 = vsel %vm238, %v1916, %v1914
    %v1919 = vmul.f32 %v1918, %v49
    %v1920 = vmul.f32 %v1917, %v242
    %v1921 = vpack.c.bf16 %v1919, %v1919
    %v1922 = vpack.c.bf16 %v1920, %v1920
    %v1924 = vsel %vm136, %v1921, 0
    %v1927 = vsel %vm136, %v1922, 0
    %1929 = vmatprep.subr.bf16.mxu0 %v1927
    %1930 = vmatpush1.bf16.msra.mxu0 %v1924
    %1931 = vmatprep.subr.bf16.mxu0 0
    %1932 = vmatpush1.bf16.msra.mxu0 0
    %1933 = vmatprep.subr.bf16.mxu0 0
    %1934 = vmatpush1.bf16.msra.mxu0 0
    %1935 = vmatprep.subr.bf16.mxu0 0
    %1936 = vmatpush1.bf16.msra.mxu0 0
    %1937 = vmatprep.subr.bf16.mxu0 0
    %1938 = vmatpush1.bf16.msra.mxu0 0
    %1939 = vmatprep.subr.bf16.mxu0 0
    %1940 = vmatpush1.bf16.msra.mxu0 0
    %1941 = vmatprep.subr.bf16.mxu0 0
    %1942 = vmatpush1.bf16.msra.mxu0 0
    %1943 = vmatprep.subr.bf16.mxu0 0
    %1944 = vmatpush1.bf16.msra.mxu0 0
    %1945 = vmatprep.subr.bf16.mxu0 0
    %1946 = vmatpush1.bf16.msra.mxu0 0
    %1947 = vmatprep.subr.bf16.mxu0 0
    %1948 = vmatpush1.bf16.msra.mxu0 0
    %1949 = vmatprep.subr.bf16.mxu0 0
    %1950 = vmatpush1.bf16.msra.mxu0 0
    %1951 = vmatprep.subr.bf16.mxu0 0
    %1952 = vmatpush1.bf16.msra.mxu0 0
    %1953 = vmatprep.subr.bf16.mxu0 0
    %1954 = vmatpush1.bf16.msra.mxu0 0
    %1955 = vmatprep.subr.bf16.mxu0 0
    %1956 = vmatpush1.bf16.msra.mxu0 0
    %1957 = vmatprep.subr.bf16.mxu0 0
    %1958 = vmatpush1.bf16.msra.mxu0 0
    %1959 = vmatprep.subr.bf16.mxu0 0
    %1960 = vmatpush1.bf16.msra.mxu0 0
    %1961 = vmatprep.mubr.bf16.mxu0 0
    %1962 = vmatmul.mubr.bf16.gmra.mrb[0].mxu0 %v831
    %v1963 = vpop.f32.mrb[0].mxu0
    %v1964 = vadd.f32 0.0, %v1963
    %v1965 = vpop.f32.mrb[0].mxu0
    %v1966 = vadd.f32 0.0, %v1965
    %v1967 = vpop.f32.mrb[0].mxu0
    %v1968 = vpop.f32.mrb[0].mxu0
    %1969 = vdwg.mxu0
    %v1970 = vadd.f32 %v1907, %v1964
    %v1971 = vadd.f32 %v1909, %v1966
    %1972 = vrot.lane.b32.xlu0 %v1797, 1
    %v1973 = vpop.permute.xlu0 %1972
    %1974 = vrot.lane.b32.xlu0 %v1798, 1
    %v1975 = vpop.permute.xlu0 %1974
    %v1976 = vsel %vm304, %v1973, %v1975
    %v1977 = vsel %vm304, %v1975, %v1973
    %v1978 = vmul.f32 %v1977, %v51
    %v1979 = vmul.f32 %v1976, %v308
    %v1980 = vpack.c.bf16 %v1978, %v1978
    %v1981 = vpack.c.bf16 %v1979, %v1979
    %v1983 = vsel %vm136, %v1980, 0
    %v1986 = vsel %vm136, %v1981, 0
    %1988 = vmatprep.subr.bf16.mxu0 %v1986
    %1989 = vmatpush1.bf16.msra.mxu0 %v1983
    %1990 = vmatprep.subr.bf16.mxu0 0
    %1991 = vmatpush1.bf16.msra.mxu0 0
    %1992 = vmatprep.subr.bf16.mxu0 0
    %1993 = vmatpush1.bf16.msra.mxu0 0
    %1994 = vmatprep.subr.bf16.mxu0 0
    %1995 = vmatpush1.bf16.msra.mxu0 0
    %1996 = vmatprep.subr.bf16.mxu0 0
    %1997 = vmatpush1.bf16.msra.mxu0 0
    %1998 = vmatprep.subr.bf16.mxu0 0
    %1999 = vmatpush1.bf16.msra.mxu0 0
    %2000 = vmatprep.subr.bf16.mxu0 0
    %2001 = vmatpush1.bf16.msra.mxu0 0
    %2002 = vmatprep.subr.bf16.mxu0 0
    %2003 = vmatpush1.bf16.msra.mxu0 0
    %2004 = vmatprep.subr.bf16.mxu0 0
    %2005 = vmatpush1.bf16.msra.mxu0 0
    %2006 = vmatprep.subr.bf16.mxu0 0
    %2007 = vmatpush1.bf16.msra.mxu0 0
    %2008 = vmatprep.subr.bf16.mxu0 0
    %2009 = vmatpush1.bf16.msra.mxu0 0
    %2010 = vmatprep.subr.bf16.mxu0 0
    %2011 = vmatpush1.bf16.msra.mxu0 0
    %2012 = vmatprep.subr.bf16.mxu0 0
    %2013 = vmatpush1.bf16.msra.mxu0 0
    %2014 = vmatprep.subr.bf16.mxu0 0
    %2015 = vmatpush1.bf16.msra.mxu0 0
    %2016 = vmatprep.subr.bf16.mxu0 0
    %2017 = vmatpush1.bf16.msra.mxu0 0
    %2018 = vmatprep.subr.bf16.mxu0 0
    %2019 = vmatpush1.bf16.msra.mxu0 0
    %2020 = vmatprep.mubr.bf16.mxu0 0
    %2021 = vmatmul.mubr.bf16.gmra.mrb[0].mxu0 %v893
    %v2022 = vpop.f32.mrb[0].mxu0
    %v2023 = vadd.f32 0.0, %v2022
    %v2024 = vpop.f32.mrb[0].mxu0
    %v2025 = vadd.f32 0.0, %v2024
    %v2026 = vpop.f32.mrb[0].mxu0
    %v2027 = vpop.f32.mrb[0].mxu0
    %2028 = vdwg.mxu0
    %v2029 = vadd.f32 %v1970, %v2023
    %v2030 = vadd.f32 %v1971, %v2025
    %v2031 = vpack.c.bf16 %v1797, %v1797
    %v2032 = vpack.c.bf16 %v1798, %v1798
    %v2034 = vsel %vm136, %v2031, 0
    %v2037 = vsel %vm136, %v2032, 0
    %2039 = vmatprep.subr.bf16.mxu0 %v2037
    %2040 = vmatpush1.bf16.msra.mxu0 %v2034
    %2041 = vmatprep.subr.bf16.mxu0 0
    %2042 = vmatpush1.bf16.msra.mxu0 0
    %2043 = vmatprep.subr.bf16.mxu0 0
    %2044 = vmatpush1.bf16.msra.mxu0 0
    %2045 = vmatprep.subr.bf16.mxu0 0
    %2046 = vmatpush1.bf16.msra.mxu0 0
    %2047 = vmatprep.subr.bf16.mxu0 0
    %2048 = vmatpush1.bf16.msra.mxu0 0
    %2049 = vmatprep.subr.bf16.mxu0 0
    %2050 = vmatpush1.bf16.msra.mxu0 0
    %2051 = vmatprep.subr.bf16.mxu0 0
    %2052 = vmatpush1.bf16.msra.mxu0 0
    %2053 = vmatprep.subr.bf16.mxu0 0
    %2054 = vmatpush1.bf16.msra.mxu0 0
    %2055 = vmatprep.subr.bf16.mxu0 0
    %2056 = vmatpush1.bf16.msra.mxu0 0
    %2057 = vmatprep.subr.bf16.mxu0 0
    %2058 = vmatpush1.bf16.msra.mxu0 0
    %2059 = vmatprep.subr.bf16.mxu0 0
    %2060 = vmatpush1.bf16.msra.mxu0 0
    %2061 = vmatprep.subr.bf16.mxu0 0
    %2062 = vmatpush1.bf16.msra.mxu0 0
    %2063 = vmatprep.subr.bf16.mxu0 0
    %2064 = vmatpush1.bf16.msra.mxu0 0
    %2065 = vmatprep.subr.bf16.mxu0 0
    %2066 = vmatpush1.bf16.msra.mxu0 0
    %2067 = vmatprep.subr.bf16.mxu0 0
    %2068 = vmatpush1.bf16.msra.mxu0 0
    %2069 = vmatprep.subr.bf16.mxu0 0
    %2070 = vmatpush1.bf16.msra.mxu0 0
    %2071 = vmatprep.mubr.bf16.mxu0 0
    %2072 = vmatmul.mubr.bf16.gmra.mrb[0].mxu0 %v947
    %v2073 = vpop.f32.mrb[0].mxu0
    %v2074 = vadd.f32 0.0, %v2073
    %v2075 = vpop.f32.mrb[0].mxu0
    %v2076 = vadd.f32 0.0, %v2075
    %v2077 = vpop.f32.mrb[0].mxu0
    %v2078 = vpop.f32.mrb[0].mxu0
    %2079 = vdwg.mxu0
    %v2080 = vadd.f32 %v2029, %v2074
    %v2081 = vadd.f32 %v2030, %v2076
    %2082 = vrot.lane.b32.xlu0 %v1797, 127
    %v2083 = vpop.permute.xlu0 %2082
    %2084 = vrot.lane.b32.xlu0 %v1798, 127
    %v2085 = vpop.permute.xlu0 %2084
    %v2086 = vsel %vm424, %v2083, %v2085
    %v2087 = vsel %vm424, %v2085, %v2083
    %v2088 = vmul.f32 %v2086, %v53
    %v2089 = vmul.f32 %v2087, %v428
    %v2090 = vpack.c.bf16 %v2088, %v2088
    %v2091 = vpack.c.bf16 %v2089, %v2089
    %v2093 = vsel %vm136, %v2090, 0
    %v2096 = vsel %vm136, %v2091, 0
    %2098 = vmatprep.subr.bf16.mxu0 %v2096
    %2099 = vmatpush1.bf16.msra.mxu0 %v2093
    %2100 = vmatprep.subr.bf16.mxu0 0
    %2101 = vmatpush1.bf16.msra.mxu0 0
    %2102 = vmatprep.subr.bf16.mxu0 0
    %2103 = vmatpush1.bf16.msra.mxu0 0
    %2104 = vmatprep.subr.bf16.mxu0 0
    %2105 = vmatpush1.bf16.msra.mxu0 0
    %2106 = vmatprep.subr.bf16.mxu0 0
    %2107 = vmatpush1.bf16.msra.mxu0 0
    %2108 = vmatprep.subr.bf16.mxu0 0
    %2109 = vmatpush1.bf16.msra.mxu0 0
    %2110 = vmatprep.subr.bf16.mxu0 0
    %2111 = vmatpush1.bf16.msra.mxu0 0
    %2112 = vmatprep.subr.bf16.mxu0 0
    %2113 = vmatpush1.bf16.msra.mxu0 0
    %2114 = vmatprep.subr.bf16.mxu0 0
    %2115 = vmatpush1.bf16.msra.mxu0 0
    %2116 = vmatprep.subr.bf16.mxu0 0
    %2117 = vmatpush1.bf16.msra.mxu0 0
    %2118 = vmatprep.subr.bf16.mxu0 0
    %2119 = vmatpush1.bf16.msra.mxu0 0
    %2120 = vmatprep.subr.bf16.mxu0 0
    %2121 = vmatpush1.bf16.msra.mxu0 0
    %2122 = vmatprep.subr.bf16.mxu0 0
    %2123 = vmatpush1.bf16.msra.mxu0 0
    %2124 = vmatprep.subr.bf16.mxu0 0
    %2125 = vmatpush1.bf16.msra.mxu0 0
    %2126 = vmatprep.subr.bf16.mxu0 0
    %2127 = vmatpush1.bf16.msra.mxu0 0
    %2128 = vmatprep.subr.bf16.mxu0 0
    %2129 = vmatpush1.bf16.msra.mxu0 0
    %2130 = vmatprep.mubr.bf16.mxu0 0
    %2131 = vmatmul.mubr.bf16.gmra.mrb[0].mxu0 %v1009
    %v2132 = vpop.f32.mrb[0].mxu0
    %v2133 = vadd.f32 0.0, %v2132
    %v2134 = vpop.f32.mrb[0].mxu0
    %v2135 = vadd.f32 0.0, %v2134
    %v2136 = vpop.f32.mrb[0].mxu0
    %v2137 = vpop.f32.mrb[0].mxu0
    %2138 = vdwg.mxu0
    %v2139 = vadd.f32 %v2080, %v2133
    %v2140 = vadd.f32 %v2081, %v2135
    %2141 = vrot.lane.b32.xlu0 %v1797, 113
    %v2142 = vpop.permute.xlu0 %2141
    %2143 = vrot.lane.b32.xlu0 %v1798, 113
    %v2144 = vpop.permute.xlu0 %2143
    %v2145 = vsel %vm490, %v2142, %v2144
    %v2146 = vsel %vm490, %v2144, %v2142
    %v2147 = vmul.f32 %v2145, %v55
    %v2148 = vmul.f32 %v2146, %v494
    %v2149 = vpack.c.bf16 %v2147, %v2147
    %v2150 = vpack.c.bf16 %v2148, %v2148
    %v2152 = vsel %vm136, %v2149, 0
    %v2155 = vsel %vm136, %v2150, 0
    %2157 = vmatprep.subr.bf16.mxu0 %v2155
    %2158 = vmatpush1.bf16.msra.mxu0 %v2152
    %2159 = vmatprep.subr.bf16.mxu0 0
    %2160 = vmatpush1.bf16.msra.mxu0 0
    %2161 = vmatprep.subr.bf16.mxu0 0
    %2162 = vmatpush1.bf16.msra.mxu0 0
    %2163 = vmatprep.subr.bf16.mxu0 0
    %2164 = vmatpush1.bf16.msra.mxu0 0
    %2165 = vmatprep.subr.bf16.mxu0 0
    %2166 = vmatpush1.bf16.msra.mxu0 0
    %2167 = vmatprep.subr.bf16.mxu0 0
    %2168 = vmatpush1.bf16.msra.mxu0 0
    %2169 = vmatprep.subr.bf16.mxu0 0
    %2170 = vmatpush1.bf16.msra.mxu0 0
    %2171 = vmatprep.subr.bf16.mxu0 0
    %2172 = vmatpush1.bf16.msra.mxu0 0
    %2173 = vmatprep.subr.bf16.mxu0 0
    %2174 = vmatpush1.bf16.msra.mxu0 0
    %2175 = vmatprep.subr.bf16.mxu0 0
    %2176 = vmatpush1.bf16.msra.mxu0 0
    %2177 = vmatprep.subr.bf16.mxu0 0
    %2178 = vmatpush1.bf16.msra.mxu0 0
    %2179 = vmatprep.subr.bf16.mxu0 0
    %2180 = vmatpush1.bf16.msra.mxu0 0
    %2181 = vmatprep.subr.bf16.mxu0 0
    %2182 = vmatpush1.bf16.msra.mxu0 0
    %2183 = vmatprep.subr.bf16.mxu0 0
    %2184 = vmatpush1.bf16.msra.mxu0 0
    %2185 = vmatprep.subr.bf16.mxu0 0
    %2186 = vmatpush1.bf16.msra.mxu0 0
    %2187 = vmatprep.subr.bf16.mxu0 0
    %2188 = vmatpush1.bf16.msra.mxu0 0
    %2189 = vmatprep.mubr.bf16.mxu0 0
    %2190 = vmatmul.mubr.bf16.gmra.mrb[0].mxu0 %v1071
    %v2191 = vpop.f32.mrb[0].mxu0
    %v2192 = vadd.f32 0.0, %v2191
    %v2193 = vpop.f32.mrb[0].mxu0
    %v2194 = vadd.f32 0.0, %v2193
    %v2195 = vpop.f32.mrb[0].mxu0
    %v2196 = vpop.f32.mrb[0].mxu0
    %2197 = vdwg.mxu0
    %v2198 = vadd.f32 %v2139, %v2192
    %v2199 = vadd.f32 %v2140, %v2194
    %2200 = vrot.lane.b32.xlu0 %v1797, 112
    %v2201 = vpop.permute.xlu0 %2200
    %2202 = vrot.lane.b32.xlu0 %v1798, 112
    %v2203 = vpop.permute.xlu0 %2202
    %v2204 = vsel %vm556, %v2201, %v2203
    %v2205 = vsel %vm556, %v2203, %v2201
    %v2206 = vmul.f32 %v2204, %v57
    %v2207 = vmul.f32 %v2205, %v560
    %v2208 = vpack.c.bf16 %v2206, %v2206
    %v2209 = vpack.c.bf16 %v2207, %v2207
    %v2211 = vsel %vm136, %v2208, 0
    %v2214 = vsel %vm136, %v2209, 0
    %2216 = vmatprep.subr.bf16.mxu0 %v2214
    %2217 = vmatpush1.bf16.msra.mxu0 %v2211
    %2218 = vmatprep.subr.bf16.mxu0 0
    %2219 = vmatpush1.bf16.msra.mxu0 0
    %2220 = vmatprep.subr.bf16.mxu0 0
    %2221 = vmatpush1.bf16.msra.mxu0 0
    %2222 = vmatprep.subr.bf16.mxu0 0
    %2223 = vmatpush1.bf16.msra.mxu0 0
    %2224 = vmatprep.subr.bf16.mxu0 0
    %2225 = vmatpush1.bf16.msra.mxu0 0
    %2226 = vmatprep.subr.bf16.mxu0 0
    %2227 = vmatpush1.bf16.msra.mxu0 0
    %2228 = vmatprep.subr.bf16.mxu0 0
    %2229 = vmatpush1.bf16.msra.mxu0 0
    %2230 = vmatprep.subr.bf16.mxu0 0
    %2231 = vmatpush1.bf16.msra.mxu0 0
    %2232 = vmatprep.subr.bf16.mxu0 0
    %2233 = vmatpush1.bf16.msra.mxu0 0
    %2234 = vmatprep.subr.bf16.mxu0 0
    %2235 = vmatpush1.bf16.msra.mxu0 0
    %2236 = vmatprep.subr.bf16.mxu0 0
    %2237 = vmatpush1.bf16.msra.mxu0 0
    %2238 = vmatprep.subr.bf16.mxu0 0
    %2239 = vmatpush1.bf16.msra.mxu0 0
    %2240 = vmatprep.subr.bf16.mxu0 0
    %2241 = vmatpush1.bf16.msra.mxu0 0
    %2242 = vmatprep.subr.bf16.mxu0 0
    %2243 = vmatpush1.bf16.msra.mxu0 0
    %2244 = vmatprep.subr.bf16.mxu0 0
    %2245 = vmatpush1.bf16.msra.mxu0 0
    %2246 = vmatprep.subr.bf16.mxu0 0
    %2247 = vmatpush1.bf16.msra.mxu0 0
    %2248 = vmatprep.mubr.bf16.mxu0 0
    %2249 = vmatmul.mubr.bf16.gmra.mrb[0].mxu0 %v1133
    %v2250 = vpop.f32.mrb[0].mxu0
    %v2251 = vadd.f32 0.0, %v2250
    %v2252 = vpop.f32.mrb[0].mxu0
    %v2253 = vadd.f32 0.0, %v2252
    %v2254 = vpop.f32.mrb[0].mxu0
    %v2255 = vpop.f32.mrb[0].mxu0
    %2256 = vdwg.mxu0
    %v2257 = vadd.f32 %v2198, %v2251
    %v2258 = vadd.f32 %v2199, %v2253
    %2259 = vrot.lane.b32.xlu0 %v1797, 111
    %v2260 = vpop.permute.xlu0 %2259
    %2261 = vrot.lane.b32.xlu0 %v1798, 111
    %v2262 = vpop.permute.xlu0 %2261
    %v2263 = vsel %vm622, %v2260, %v2262
    %v2264 = vsel %vm622, %v2262, %v2260
    %v2265 = vmul.f32 %v2263, %v59
    %v2266 = vmul.f32 %v2264, %v626
    %v2267 = vpack.c.bf16 %v2265, %v2265
    %v2268 = vpack.c.bf16 %v2266, %v2266
    %v2270 = vsel %vm136, %v2267, 0
    %v2273 = vsel %vm136, %v2268, 0
    %2275 = vmatprep.subr.bf16.mxu0 %v2273
    %2276 = vmatpush1.bf16.msra.mxu0 %v2270
    %2277 = vmatprep.subr.bf16.mxu0 0
    %2278 = vmatpush1.bf16.msra.mxu0 0
    %2279 = vmatprep.subr.bf16.mxu0 0
    %2280 = vmatpush1.bf16.msra.mxu0 0
    %2281 = vmatprep.subr.bf16.mxu0 0
    %2282 = vmatpush1.bf16.msra.mxu0 0
    %2283 = vmatprep.subr.bf16.mxu0 0
    %2284 = vmatpush1.bf16.msra.mxu0 0
    %2285 = vmatprep.subr.bf16.mxu0 0
    %2286 = vmatpush1.bf16.msra.mxu0 0
    %2287 = vmatprep.subr.bf16.mxu0 0
    %2288 = vmatpush1.bf16.msra.mxu0 0
    %2289 = vmatprep.subr.bf16.mxu0 0
    %2290 = vmatpush1.bf16.msra.mxu0 0
    %2291 = vmatprep.subr.bf16.mxu0 0
    %2292 = vmatpush1.bf16.msra.mxu0 0
    %2293 = vmatprep.subr.bf16.mxu0 0
    %2294 = vmatpush1.bf16.msra.mxu0 0
    %2295 = vmatprep.subr.bf16.mxu0 0
    %2296 = vmatpush1.bf16.msra.mxu0 0
    %2297 = vmatprep.subr.bf16.mxu0 0
    %2298 = vmatpush1.bf16.msra.mxu0 0
    %2299 = vmatprep.subr.bf16.mxu0 0
    %2300 = vmatpush1.bf16.msra.mxu0 0
    %2301 = vmatprep.subr.bf16.mxu0 0
    %2302 = vmatpush1.bf16.msra.mxu0 0
    %2303 = vmatprep.subr.bf16.mxu0 0
    %2304 = vmatpush1.bf16.msra.mxu0 0
    %2305 = vmatprep.subr.bf16.mxu0 0
    %2306 = vmatpush1.bf16.msra.mxu0 0
    %2307 = vmatprep.mubr.bf16.mxu0 0
    %2308 = vmatmul.mubr.bf16.gmra.mrb[0].mxu0 %v1195
    %v2309 = vpop.f32.mrb[0].mxu0
    %v2310 = vadd.f32 0.0, %v2309
    %v2311 = vpop.f32.mrb[0].mxu0
    %v2312 = vadd.f32 0.0, %v2311
    %v2313 = vpop.f32.mrb[0].mxu0
    %v2314 = vpop.f32.mrb[0].mxu0
    %2315 = vdwg.mxu0
    %v2316 = vadd.f32 %v2257, %v2310
    %v2317 = vadd.f32 %v2258, %v2312
    %v2318 = vmul.f32 %v2316, %v1249
    %v2319 = vmul.f32 %v2317, %v1249
    %v2320 = vadd.f32 %v2318, %v1256
    %v2321 = vadd.f32 %v2319, %v1256
    %v2322 = vadd.f32 %v2320, %v1270
    %v2323 = vadd.f32 %v2321, %v1272
    %v2324 = vmax.f32 %v2322, 0.0
    %v2325 = vmax.f32 %v2323, 0.0
    %v2328 = vcombine.low %v2324, %v2325
    %s2330 = scalar_lea.vmem [#allocation5], 8
    %2331 = vst [vmem:[%s2330] sm:$0xff] %v2328
    // Predicated region
    $region38: #{tpu_custom_call.1} parent=1 // pred_check
      _
    $region39: #{tpu_custom_call.1} parent=1 // pred_check_branch
      %2333 = sbr.rel (0) target = $region41
    $region40: #{tpu_custom_call.1} parent=1 // pred_region
      %s2335 = ssub.s32 256, 256
      %2336 = vsyncadd [#allocation4], %s2335
      %s2337 = sshll.u32 [#allocation5], 4
      %s2338 = int_to_ptr.vmem [resolvable:$true] %s2337
      %2343 = dma.vmem_to_hbm [thread:$0]  %s2338, 256, %s8, [#allocation4], 128, 128, 8
    $region41: #{tpu_custom_call.1} parent=1 // pred_fallthru
      _
    // Predicated region
    $region42: #{tpu_custom_call.1} parent=1 // pred_check
      _
    $region43: #{tpu_custom_call.1} parent=1 // pred_check_branch
      %2345 = sbr.rel (0) target = $region45
    $region44: #{tpu_custom_call.1} parent=1 // pred_region
      %2346 = dma.done [#allocation4], 256
    $region45: #{tpu_custom_call.1} parent=1 // pred_fallthru
      _
    %2347 = vsyncpa [#allocation3], 1
    %2348 = vsyncpa [#allocation4], 1

</llo_original>
